<compile_context>
chip_gen: v5e
topology: v5e:2x2
jax: 0.10.0
libtpu: 0.0.40
codegen_flags: <defaults>
</compile_context>

<pallas_src>
import functools

import jax
import jax.numpy as jnp
from jax.experimental import pallas as pl
from jax.experimental.pallas import tpu as pltpu

BN_EPS = 1e-5


# --------------------------------------------------------------------------
# Tiling / VMEM helpers
# --------------------------------------------------------------------------
def _vmem_budget_bytes():
    """Per-generation VMEM budget (~70% of physical: ~45 MiB v7x, ~90 MiB v5e/v6e)."""
    cap = 64 * 1024 * 1024  # conservative default (v7x physical size)
    try:
        info = pltpu.get_tpu_info()
        cap = int(getattr(info, "vmem_capacity_bytes", cap) or cap)
    except Exception:
        pass
    return int(cap * 0.7)


def _pick_tile(hw, c, hidden, out_dim, vmem_budget):
    """Pick the lane tile TM.

    Targets ~2 MiB of x per grid step (HBM-bound sweet spot) and caps TM so the
    double-buffered x/out blocks plus the (hidden, TM) matmul intermediate fit
    in the per-generation VMEM budget.  Returns (TM, num_m, needs_mask).
    """
    if hw <= 128:
        return hw, 1, False
    # double-buffered x/out blocks + (hidden, TM) / (out, TM) intermediates
    bytes_per_lane = 4 * (2 * c + 2 * out_dim + 2 * hidden)
    tm_vmem = max(int(vmem_budget * 0.6) // bytes_per_lane, 128)
    tm_target = max((2 * 1024 * 1024) // (4 * c), 512)      # ~2 MiB of x per step
    tm = min(tm_target, tm_vmem, hw)
    tm -= tm % 128
    tm = max(tm, 128)
    if tm >= hw:
        return hw, 1, False
    if hw % 128 == 0:
        t = tm
        while t >= 128:                                       # prefer an exact divisor
            if hw % t == 0:
                return t, hw // t, False
            t -= 128
    num_m = pl.cdiv(hw, tm)
    return tm, num_m, (num_m * tm != hw)


def _lane_width(tm):
    return 128 if tm % 128 == 0 else 1


def _lane_fold(v, lane_w):
    """Fold the lane axis of (rows, TM) to (rows, lane_w) with VPU adds only."""
    rows, tm = v.shape
    if lane_w == 1:
        return jnp.sum(v, axis=-1, keepdims=True)
    if tm > lane_w:
        return v.reshape(rows, tm // lane_w, lane_w).sum(axis=1)
    return v


# --------------------------------------------------------------------------
# Kernels
# --------------------------------------------------------------------------
def _bn1_stats_kernel(x_ref, sumx_ref, gram_ref, *, hw, tm, lane_w, needs_mask,
                      compute_dtype):
    """Per-n input moments: sum_x (C, lane_w) and Gram = x @ x^T (C, C)."""
    m = pl.program_id(1)

    @pl.when(m == 0)
    def _():
        sumx_ref[...] = jnp.zeros_like(sumx_ref)
        gram_ref[...] = jnp.zeros_like(gram_ref)

    x = x_ref[0]                                    # (C, TM) f32
    if needs_mask:
        lane = jax.lax.broadcasted_iota(jnp.int32, (1, tm), 1)
        x = jnp.where(m * tm + lane < hw, x, 0.0)
    sumx_ref[...] += _lane_fold(x, lane_w)[None]
    xc = x.astype(compute_dtype)
    gram_ref[...] += jax.lax.dot_general(
        xc, xc, (((1,), (1,)), ((), ())),
        preferred_element_type=jnp.float32)[None]


def _bn2_stats_kernel(x_ref, w1s_ref, t1_ref, w2_ref, sum_ref, ssq_ref, *, hw, tm,
                      lane_w, needs_mask, compute_dtype):
    """Per-n stats of y = W2 @ relu(W1s @ x + t1) (BN1 already folded)."""
    m = pl.program_id(1)

    @pl.when(m == 0)
    def _():
        sum_ref[...] = jnp.zeros_like(sum_ref)
        ssq_ref[...] = jnp.zeros_like(ssq_ref)

    x = x_ref[0].astype(compute_dtype)
    h = jnp.dot(w1s_ref[...], x, preferred_element_type=jnp.float32)
    h = jnp.maximum(h + t1_ref[...], 0.0)
    if needs_mask:
        lane = jax.lax.broadcasted_iota(jnp.int32, (1, tm), 1)
        h = jnp.where(m * tm + lane < hw, h, 0.0)
    y = jnp.dot(w2_ref[...], h.astype(compute_dtype),
                preferred_element_type=jnp.float32)
    sum_ref[...] += _lane_fold(y, lane_w)[None]
    ssq_ref[...] += _lane_fold(y * y, lane_w)[None]


def _apply_kernel(x_ref, w1s_ref, t1_ref, w2s_ref, t2_ref, o_ref, *, compute_dtype):
    """out = W2s @ relu(W1s @ x + t1) + t2 — both BNs folded into scale/shift."""
    x = x_ref[0].astype(compute_dtype)
    h = jnp.dot(w1s_ref[...], x, preferred_element_type=jnp.float32)
    h = jnp.maximum(h + t1_ref[...], 0.0)
    y = jnp.dot(w2s_ref[...], h.astype(compute_dtype),
                preferred_element_type=jnp.float32)
    o_ref[0] = (y + t2_ref[...]).astype(o_ref.dtype)


# --------------------------------------------------------------------------
# Parameters / forward wrapper
# --------------------------------------------------------------------------
def init_channel_block_params(key, in_dim, hidden_dim, out_dim):
    """Deterministic synthetic parameters matching the PyTorch module's shapes."""
    k1, k2, k3, k4 = jax.random.split(key, 4)
    w1 = jax.random.normal(k1, (hidden_dim, in_dim), jnp.float32) * (in_dim ** -0.5)
    b1 = jax.random.normal(k2, (hidden_dim,), jnp.float32) * 0.01
    w2 = jax.random.normal(k3, (out_dim, hidden_dim), jnp.float32) * (hidden_dim ** -0.5)
    b2 = jax.random.normal(k4, (out_dim,), jnp.float32) * 0.01
    return dict(w1=w1, b1=b1, g1=jnp.ones((hidden_dim,), jnp.float32),
                be1=jnp.zeros((hidden_dim,), jnp.float32),
                w2=w2, b2=b2, g2=jnp.ones((out_dim,), jnp.float32),
                be2=jnp.zeros((out_dim,), jnp.float32))


@functools.partial(jax.jit, static_argnames=("shuffle", "compute_dtype"))
def channel_block_forward(x_nchw, params, shuffle=False, shuffle_key=None,
                          compute_dtype=jnp.float32):
    """Forward pass of ChannelBlock. x_nchw: (N, C, H, W) float32, NCHW kept."""
    N, C, H, W = x_nchw.shape
    hidden = params["w1"].shape[0]
    out_dim = params["w2"].shape[0]
    HW = H * W
    M = float(N * HW)

    budget = _vmem_budget_bytes()
    TM, num_m, needs_mask = _pick_tile(HW, C, hidden, out_dim, budget)
    LW = _lane_width(TM)

    x3 = x_nchw.reshape(N, C, HW)        # free reshape, keeps NCHW lane-dense

    w1 = params["w1"]                    # (hidden, Cin) — native conv orientation
    w2 = params["w2"]                    # (out, hidden)
    if shuffle:
        # PyTorch permutes dim 1 of conv2.weight (out, in, 1, 1) -> permute the
        # input (hidden) channels of conv2. Deterministic permutation here.
        if shuffle_key is None:
            shuffle_key = jax.random.PRNGKey(123)
        perm = jax.random.permutation(shuffle_key, hidden)
        w2 = w2[:, perm]

    grid = (N, num_m)

    # Deepen x pipelining only when per-step blocks are small and the grid is
    # long enough for it to matter (DMA latency exposed at tiny tiles).
    deep_x = (4 * C * TM < 512 * 1024) and (N * num_m > 2)

    def x_spec(deep):
        idx = lambda n, m: (n, 0, m)
        if deep:
            try:
                return pl.BlockSpec((1, C, TM), idx, pipeline_mode=pl.Buffered(3))
            except TypeError:            # older jax without pipeline_mode kwarg
                pass
        return pl.BlockSpec((1, C, TM), idx)

    def const_spec(arr):
        return pl.BlockSpec(arr.shape, lambda n, m: (0, 0))

    def stat_spec(rows, lw):
        return pl.BlockSpec((1, rows, lw), lambda n, m: (n, 0, 0))

    stats_params = pltpu.CompilerParams(
        dimension_semantics=("parallel", "arbitrary"),   # n across TCs, m accumulates
        vmem_limit_bytes=budget)
    apply_params = pltpu.CompilerParams(
        dimension_semantics=("parallel", "parallel"),
        vmem_limit_bytes=budget)

    xbytes = 4 * N * HW * C

    # ---- Pass 1: input moments -> BN1 statistics ---------------------------
    sumx_p, gram_p = pl.pallas_call(
        functools.partial(_bn1_stats_kernel, hw=HW, tm=TM, lane_w=LW,
                          needs_mask=needs_mask, compute_dtype=compute_dtype),
        grid=grid,
        in_specs=[x_spec(deep_x)],
        out_specs=(stat_spec(C, LW),
                   pl.BlockSpec((1, C, C), lambda n, m: (n, 0, 0))),
        out_shape=(jax.ShapeDtypeStruct((N, C, LW), jnp.float32),
                   jax.ShapeDtypeStruct((N, C, C), jnp.float32)),
        compiler_params=stats_params,
        cost_estimate=pl.CostEstimate(flops=2 * N * HW * C * (C + 1),
                                      transcendentals=0, bytes_accessed=xbytes),
    )(x3)

    sum_x = jnp.sum(sumx_p, axis=(0, 2))                       # (C,)
    gram = jnp.sum(gram_p, axis=0)                             # (C, C)
    mean1 = (w1 @ (sum_x / M))[:, None]                        # E[W1 x]   (hidden, 1)
    e_h2 = jnp.sum((w1 @ (gram / M)) * w1, axis=1)[:, None]    # E[(W1 x)^2]
    var1 = jnp.maximum(e_h2 - mean1 * mean1, 0.0)              # biased var (BN training)
    s1 = params["g1"][:, None] * jax.lax.rsqrt(var1 + BN_EPS)
    t1 = params["be1"][:, None] - mean1 * s1
    w1s = s1 * w1                                              # fold BN1 scale into conv1
    w1s_c = w1s.astype(compute_dtype)
    w2_c = w2.astype(compute_dtype)

    # ---- Pass 2: BN2 statistics --------------------------------------------
    sum2_p, ssq2_p = pl.pallas_call(
        functools.partial(_bn2_stats_kernel, hw=HW, tm=TM, lane_w=LW,
                          needs_mask=needs_mask, compute_dtype=compute_dtype),
        grid=grid,
        in_specs=[x_spec(deep_x), const_spec(w1s_c), const_spec(t1),
                  const_spec(w2_c)],
        out_specs=(stat_spec(out_dim, LW), stat_spec(out_dim, LW)),
        out_shape=(jax.ShapeDtypeStruct((N, out_dim, LW), jnp.float32),
                   jax.ShapeDtypeStruct((N, out_dim, LW), jnp.float32)),
        compiler_params=stats_params,
        cost_estimate=pl.CostEstimate(
            flops=2 * N * HW * (C * hidden + hidden * out_dim + 2 * out_dim),
            transcendentals=0, bytes_accessed=xbytes),
    )(x3, w1s_c, t1, w2_c)

    mean2 = (jnp.sum(sum2_p, axis=(0, 2)) / M)[:, None]
    e_y2 = (jnp.sum(ssq2_p, axis=(0, 2)) / M)[:, None]
    var2 = jnp.maximum(e_y2 - mean2 * mean2, 0.0)
    s2 = params["g2"][:, None] * jax.lax.rsqrt(var2 + BN_EPS)
    t2 = params["be2"][:, None] - mean2 * s2
    w2s_c = (s2 * w2).astype(compute_dtype)                    # fold BN2 scale into conv2

    # ---- Pass 3: apply (fully parallel, lane-dense NCHW output) ------------
    out3 = pl.pallas_call(
        functools.partial(_apply_kernel, compute_dtype=compute_dtype),
        grid=grid,
        in_specs=[x_spec(False), const_spec(w1s_c), const_spec(t1),
                  const_spec(w2s_c), const_spec(t2)],
        out_specs=pl.BlockSpec((1, out_dim, TM), lambda n, m: (n, 0, m)),
        out_shape=jax.ShapeDtypeStruct((N, out_dim, HW), jnp.float32),
        compiler_params=apply_params,
        cost_estimate=pl.CostEstimate(
            flops=2 * N * HW * (C * hidden + hidden * out_dim),
            transcendentals=0, bytes_accessed=4 * N * HW * (C + out_dim)),
    )(x3, w1s_c, t1, w2s_c, t2)

    return out3.reshape(N, out_dim, H, W)

# TODO(synk): PyTorch BatchNorm2d in training also updates running_mean /
# running_var buffers (with unbiased variance); only the normalized forward
# output is reproduced here.


# --------------------------------------------------------------------------
# Pure-JAX reference with the exact module semantics (incl. conv biases)
# --------------------------------------------------------------------------
def _reference_forward(x_nchw, params, shuffle=False, shuffle_key=None):
    N, C, H, W = x_nchw.shape
    x = jnp.transpose(x_nchw, (0, 2, 3, 1)).reshape(-1, C)
    h = x @ params["w1"].T + params["b1"]
    m = h.mean(0)
    v = ((h - m) ** 2).mean(0)
    h = (h - m) / jnp.sqrt(v + BN_EPS) * params["g1"] + params["be1"]
    h = jnp.maximum(h, 0.0)
    w2 = params["w2"]
    if shuffle:
        if shuffle_key is None:
            shuffle_key = jax.random.PRNGKey(123)
        perm = jax.random.permutation(shuffle_key, w2.shape[1])
        w2 = w2[:, perm]
    y = h @ w2.T + params["b2"]
    m2 = y.mean(0)
    v2 = ((y - m2) ** 2).mean(0)
    y = (y - m2) / jnp.sqrt(v2 + BN_EPS) * params["g2"] + params["be2"]
    return jnp.transpose(y.reshape(N, H, W, -1), (0, 3, 1, 2))


if __name__ == "__main__":
    # Small shapes consistent with the module: in_dim=4, hidden_dim=32, out_dim=4
    N, C, H, W = 2, 4, 16, 16
    hidden_dim, out_dim = 32, 4

    key = jax.random.PRNGKey(0)
    kx, kp = jax.random.split(key)
    x = jax.random.normal(kx, (N, C, H, W), jnp.float32)
    params = init_channel_block_params(kp, C, hidden_dim, out_dim)

    # g (shuffle=False), f32 MXU operands — exact against the reference
    out = jax.block_until_ready(channel_block_forward(x, params, shuffle=False))
    ref = _reference_forward(x, params, shuffle=False)
    assert out.shape == (N, out_dim, H, W)
    assert jnp.allclose(out, ref, atol=2e-4, rtol=2e-4), float(jnp.max(jnp.abs(out - ref)))

    # \hat{g} (shuffle=True) — deterministic permutation of conv2's input channels
    out_s = jax.block_until_ready(channel_block_forward(x, params, shuffle=True))
    ref_s = _reference_forward(x, params, shuffle=True)
    assert jnp.allclose(out_s, ref_s, atol=2e-4, rtol=2e-4), float(jnp.max(jnp.abs(out_s - ref_s)))

    # bf16 MXU-operand path (v6e/v7x fast path); loose sanity check only — the
    # outputs are BN-normalized so bf16 operand rounding stays well below 0.25.
    out_bf = jax.block_until_ready(
        channel_block_forward(x, params, shuffle=False, compute_dtype=jnp.bfloat16))
    assert bool(jnp.all(jnp.isfinite(out_bf)))
    assert float(jnp.max(jnp.abs(out_bf.astype(jnp.float32) - ref))) < 0.25

    print("KERNEL_OK")
</pallas_src>

<mosaic_0001>
module attributes {stable_mosaic.version = 11 : i64} {
  func.func @_bn1_stats_kernel(%arg0: i32, %arg1: i32, %arg2: memref<1x4x256xf32, #tpu.memory_space<vmem>>, %arg3: memref<1x4x128xf32, #tpu.memory_space<vmem>>, %arg4: memref<1x4x4xf32, #tpu.memory_space<vmem>>) attributes {dimension_semantics = [#tpu.dimension_semantics<parallel>, #tpu.dimension_semantics<arbitrary>], iteration_bounds = array<i64: 2, 1>, scalar_prefetch = 0 : i64, scratch_operands = 0 : i64, tpu.core_type = #tpu.core_type<tc>, window_params = [{transform_indices = @transform_0, window_bounds = array<i64: 1, 4, 256>}, {transform_indices = @transform_1, window_bounds = array<i64: 1, 4, 128>}, {transform_indices = @transform_2, window_bounds = array<i64: 1, 4, 4>}]} {
    %c0_i32 = arith.constant 0 : i32
    %0 = arith.cmpi eq, %arg1, %c0_i32 : i32
    %1 = arith.extui %0 : i1 to i32
    %c0_i32_0 = arith.constant 0 : i32
    %2 = arith.cmpi ne, %1, %c0_i32_0 : i32
    scf.if %2 {
      %cst_16 = arith.constant 0.000000e+00 : f32
      %16 = vector.broadcast %cst_16 : f32 to vector<1x4x128xf32>
      %c0_17 = arith.constant 0 : index
      %c0_18 = arith.constant 0 : index
      %c0_19 = arith.constant 0 : index
      %17 = vector.load %arg3[%c0_17, %c0_18, %c0_19] : memref<1x4x128xf32, #tpu.memory_space<vmem>>, vector<1x4x128xf32>
      tpu.vector_store %arg3[%c0_17, %c0_18, %c0_19], %16 {strides = array<i32>} : memref<1x4x128xf32, #tpu.memory_space<vmem>>, vector<1x4x128xf32>,
      %cst_20 = arith.constant 0.000000e+00 : f32
      %18 = vector.broadcast %cst_20 : f32 to vector<1x4x4xf32>
      %c0_21 = arith.constant 0 : index
      %c0_22 = arith.constant 0 : index
      %c0_23 = arith.constant 0 : index
      %19 = vector.load %arg4[%c0_21, %c0_22, %c0_23] : memref<1x4x4xf32, #tpu.memory_space<vmem>>, vector<1x4x4xf32>
      tpu.vector_store %arg4[%c0_21, %c0_22, %c0_23], %18 {strides = array<i32>} : memref<1x4x4xf32, #tpu.memory_space<vmem>>, vector<1x4x4xf32>,
    } else {
    }
    %c0 = arith.constant 0 : index
    %c0_1 = arith.constant 0 : index
    %c0_2 = arith.constant 0 : index
    %3 = vector.load %arg2[%c0, %c0_1, %c0_2] : memref<1x4x256xf32, #tpu.memory_space<vmem>>, vector<1x4x256xf32>
    %4 = vector.shape_cast %3 : vector<1x4x256xf32> to vector<4x256xf32>
    %c0_3 = arith.constant 0 : index
    %c0_4 = arith.constant 0 : index
    %c0_5 = arith.constant 0 : index
    %5 = vector.load %arg3[%c0_3, %c0_4, %c0_5] : memref<1x4x128xf32, #tpu.memory_space<vmem>>, vector<1x4x128xf32>
    %6 = vector.shape_cast %4 : vector<4x256xf32> to vector<4x2x128xf32>
    %cst = arith.constant dense<0.000000e+00> : vector<4x128xf32>
    %7 = vector.multi_reduction <add>, %6, %cst [1] : vector<4x2x128xf32> to vector<4x128xf32>
    %8 = vector.shape_cast %7 : vector<4x128xf32> to vector<1x4x128xf32>
    %9 = arith.addf %5, %8 : vector<1x4x128xf32>
    %c0_6 = arith.constant 0 : index
    %c0_7 = arith.constant 0 : index
    %c0_8 = arith.constant 0 : index
    %10 = vector.load %arg3[%c0_6, %c0_7, %c0_8] : memref<1x4x128xf32, #tpu.memory_space<vmem>>, vector<1x4x128xf32>
    tpu.vector_store %arg3[%c0_6, %c0_7, %c0_8], %9 {strides = array<i32>} : memref<1x4x128xf32, #tpu.memory_space<vmem>>, vector<1x4x128xf32>,
    %c0_9 = arith.constant 0 : index
    %c0_10 = arith.constant 0 : index
    %c0_11 = arith.constant 0 : index
    %11 = vector.load %arg4[%c0_9, %c0_10, %c0_11] : memref<1x4x4xf32, #tpu.memory_space<vmem>>, vector<1x4x4xf32>
    %cst_12 = arith.constant dense<0.000000e+00> : vector<4x4xf32>
    %12 = tpu.matmul %4, %4, %cst_12 {dimension_numbers = #tpu.dot_dimension_numbers<[1], [1], [0], [0], [0, 0, 1, 0], [], []>} : vector<4x256xf32>, vector<4x256xf32>, vector<4x4xf32> -> vector<4x4xf32>
    %13 = vector.shape_cast %12 : vector<4x4xf32> to vector<1x4x4xf32>
    %14 = arith.addf %11, %13 : vector<1x4x4xf32>
    %c0_13 = arith.constant 0 : index
    %c0_14 = arith.constant 0 : index
    %c0_15 = arith.constant 0 : index
    %15 = vector.load %arg4[%c0_13, %c0_14, %c0_15] : memref<1x4x4xf32, #tpu.memory_space<vmem>>, vector<1x4x4xf32>
    tpu.vector_store %arg4[%c0_13, %c0_14, %c0_15], %14 {strides = array<i32>} : memref<1x4x4xf32, #tpu.memory_space<vmem>>, vector<1x4x4xf32>,
    return
  }
  func.func @transform_0(%arg0: i32, %arg1: i32) -> (i32, i32, i32) {
    %c0_i32 = arith.constant 0 : i32
    %c0_i32_0 = arith.constant 0 : i32
    return %arg0, %c0_i32, %arg1 : i32, i32, i32
  }
  func.func @transform_1(%arg0: i32, %arg1: i32) -> (i32, i32, i32) {
    %c0_i32 = arith.constant 0 : i32
    %c0_i32_0 = arith.constant 0 : i32
    %c0_i32_1 = arith.constant 0 : i32
    return %arg0, %c0_i32, %c0_i32_0 : i32, i32, i32
  }
  func.func @transform_2(%arg0: i32, %arg1: i32) -> (i32, i32, i32) {
    %c0_i32 = arith.constant 0 : i32
    %c0_i32_0 = arith.constant 0 : i32
    %c0_i32_1 = arith.constant 0 : i32
    return %arg0, %c0_i32, %c0_i32_0 : i32, i32, i32
  }
}

module attributes {stable_mosaic.version = 11 : i64} {
  func.func @_bn2_stats_kernel(%arg0: i32, %arg1: i32, %arg2: memref<1x4x256xf32, #tpu.memory_space<vmem>>, %arg3: memref<32x4xf32, #tpu.memory_space<vmem>>, %arg4: memref<32x1xf32, #tpu.memory_space<vmem>>, %arg5: memref<4x32xf32, #tpu.memory_space<vmem>>, %arg6: memref<1x4x128xf32, #tpu.memory_space<vmem>>, %arg7: memref<1x4x128xf32, #tpu.memory_space<vmem>>) attributes {dimension_semantics = [#tpu.dimension_semantics<parallel>, #tpu.dimension_semantics<arbitrary>], iteration_bounds = array<i64: 2, 1>, scalar_prefetch = 0 : i64, scratch_operands = 0 : i64, tpu.core_type = #tpu.core_type<tc>, window_params = [{transform_indices = @transform_0, window_bounds = array<i64: 1, 4, 256>}, {pipeline_mode = #tpu.pipeline_mode<synchronous>, transform_indices = @transform_1, window_bounds = array<i64: 32, 4>}, {pipeline_mode = #tpu.pipeline_mode<synchronous>, transform_indices = @transform_2, window_bounds = array<i64: 32, 1>}, {pipeline_mode = #tpu.pipeline_mode<synchronous>, transform_indices = @transform_3, window_bounds = array<i64: 4, 32>}, {transform_indices = @transform_4, window_bounds = array<i64: 1, 4, 128>}, {transform_indices = @transform_5, window_bounds = array<i64: 1, 4, 128>}]} {
    %c0_i32 = arith.constant 0 : i32
    %0 = arith.cmpi eq, %arg1, %c0_i32 : i32
    %1 = arith.extui %0 : i1 to i32
    %c0_i32_0 = arith.constant 0 : i32
    %2 = arith.cmpi ne, %1, %c0_i32_0 : i32
    scf.if %2 {
      %cst_25 = arith.constant 0.000000e+00 : f32
      %27 = vector.broadcast %cst_25 : f32 to vector<1x4x128xf32>
      %c0_26 = arith.constant 0 : index
      %c0_27 = arith.constant 0 : index
      %c0_28 = arith.constant 0 : index
      %28 = vector.load %arg6[%c0_26, %c0_27, %c0_28] : memref<1x4x128xf32, #tpu.memory_space<vmem>>, vector<1x4x128xf32>
      tpu.vector_store %arg6[%c0_26, %c0_27, %c0_28], %27 {strides = array<i32>} : memref<1x4x128xf32, #tpu.memory_space<vmem>>, vector<1x4x128xf32>,
      %cst_29 = arith.constant 0.000000e+00 : f32
      %29 = vector.broadcast %cst_29 : f32 to vector<1x4x128xf32>
      %c0_30 = arith.constant 0 : index
      %c0_31 = arith.constant 0 : index
      %c0_32 = arith.constant 0 : index
      %30 = vector.load %arg7[%c0_30, %c0_31, %c0_32] : memref<1x4x128xf32, #tpu.memory_space<vmem>>, vector<1x4x128xf32>
      tpu.vector_store %arg7[%c0_30, %c0_31, %c0_32], %29 {strides = array<i32>} : memref<1x4x128xf32, #tpu.memory_space<vmem>>, vector<1x4x128xf32>,
    } else {
    }
    %c0 = arith.constant 0 : index
    %c0_1 = arith.constant 0 : index
    %c0_2 = arith.constant 0 : index
    %3 = vector.load %arg2[%c0, %c0_1, %c0_2] : memref<1x4x256xf32, #tpu.memory_space<vmem>>, vector<1x4x256xf32>
    %4 = vector.shape_cast %3 : vector<1x4x256xf32> to vector<4x256xf32>
    %c0_3 = arith.constant 0 : index
    %c0_4 = arith.constant 0 : index
    %5 = vector.load %arg3[%c0_3, %c0_4] : memref<32x4xf32, #tpu.memory_space<vmem>>, vector<32x4xf32>
    %cst = arith.constant dense<0.000000e+00> : vector<32x256xf32>
    %6 = tpu.matmul %5, %4, %cst {dimension_numbers = #tpu.dot_dimension_numbers<[1], [0], [0], [1], [0, 0, 1, 1], [], []>} : vector<32x4xf32>, vector<4x256xf32>, vector<32x256xf32> -> vector<32x256xf32>
    %c0_5 = arith.constant 0 : index
    %c0_6 = arith.constant 0 : index
    %7 = vector.load %arg4[%c0_5, %c0_6] : memref<32x1xf32, #tpu.memory_space<vmem>>, vector<32x1xf32>
    %8 = vector.broadcast %7 : vector<32x1xf32> to vector<32x256xf32>
    %9 = arith.addf %6, %8 : vector<32x256xf32>
    %cst_7 = arith.constant 0.000000e+00 : f32
    %10 = vector.broadcast %cst_7 : f32 to vector<32x256xf32>
    %11 = arith.maximumf %9, %10 : vector<32x256xf32>
    %c0_8 = arith.constant 0 : index
    %c0_9 = arith.constant 0 : index
    %12 = vector.load %arg5[%c0_8, %c0_9] : memref<4x32xf32, #tpu.memory_space<vmem>>, vector<4x32xf32>
    %cst_10 = arith.constant dense<0.000000e+00> : vector<4x256xf32>
    %13 = tpu.matmul %12, %11, %cst_10 {dimension_numbers = #tpu.dot_dimension_numbers<[1], [0], [0], [1], [0, 0, 1, 1], [], []>} : vector<4x32xf32>, vector<32x256xf32>, vector<4x256xf32> -> vector<4x256xf32>
    %c0_11 = arith.constant 0 : index
    %c0_12 = arith.constant 0 : index
    %c0_13 = arith.constant 0 : index
    %14 = vector.load %arg6[%c0_11, %c0_12, %c0_13] : memref<1x4x128xf32, #tpu.memory_space<vmem>>, vector<1x4x128xf32>
    %15 = vector.shape_cast %13 : vector<4x256xf32> to vector<4x2x128xf32>
    %cst_14 = arith.constant dense<0.000000e+00> : vector<4x128xf32>
    %16 = vector.multi_reduction <add>, %15, %cst_14 [1] : vector<4x2x128xf32> to vector<4x128xf32>
    %17 = vector.shape_cast %16 : vector<4x128xf32> to vector<1x4x128xf32>
    %18 = arith.addf %14, %17 : vector<1x4x128xf32>
    %c0_15 = arith.constant 0 : index
    %c0_16 = arith.constant 0 : index
    %c0_17 = arith.constant 0 : index
    %19 = vector.load %arg6[%c0_15, %c0_16, %c0_17] : memref<1x4x128xf32, #tpu.memory_space<vmem>>, vector<1x4x128xf32>
    tpu.vector_store %arg6[%c0_15, %c0_16, %c0_17], %18 {strides = array<i32>} : memref<1x4x128xf32, #tpu.memory_space<vmem>>, vector<1x4x128xf32>,
    %c0_18 = arith.constant 0 : index
    %c0_19 = arith.constant 0 : index
    %c0_20 = arith.constant 0 : index
    %20 = vector.load %arg7[%c0_18, %c0_19, %c0_20] : memref<1x4x128xf32, #tpu.memory_space<vmem>>, vector<1x4x128xf32>
    %21 = arith.mulf %13, %13 : vector<4x256xf32>
    %22 = vector.shape_cast %21 : vector<4x256xf32> to vector<4x2x128xf32>
    %cst_21 = arith.constant dense<0.000000e+00> : vector<4x128xf32>
    %23 = vector.multi_reduction <add>, %22, %cst_21 [1] : vector<4x2x128xf32> to vector<4x128xf32>
    %24 = vector.shape_cast %23 : vector<4x128xf32> to vector<1x4x128xf32>
    %25 = arith.addf %20, %24 : vector<1x4x128xf32>
    %c0_22 = arith.constant 0 : index
    %c0_23 = arith.constant 0 : index
    %c0_24 = arith.constant 0 : index
    %26 = vector.load %arg7[%c0_22, %c0_23, %c0_24] : memref<1x4x128xf32, #tpu.memory_space<vmem>>, vector<1x4x128xf32>
    tpu.vector_store %arg7[%c0_22, %c0_23, %c0_24], %25 {strides = array<i32>} : memref<1x4x128xf32, #tpu.memory_space<vmem>>, vector<1x4x128xf32>,
    return
  }
  func.func @transform_0(%arg0: i32, %arg1: i32) -> (i32, i32, i32) {
    %c0_i32 = arith.constant 0 : i32
    %c0_i32_0 = arith.constant 0 : i32
    return %arg0, %c0_i32, %arg1 : i32, i32, i32
  }
  func.func @transform_1(%arg0: i32, %arg1: i32) -> (i32, i32) {
    %c0_i32 = arith.constant 0 : i32
    %c0_i32_0 = arith.constant 0 : i32
    %c0_i32_1 = arith.constant 0 : i32
    return %c0_i32, %c0_i32_0 : i32, i32
  }
  func.func @transform_2(%arg0: i32, %arg1: i32) -> (i32, i32) {
    %c0_i32 = arith.constant 0 : i32
    %c0_i32_0 = arith.constant 0 : i32
    %c0_i32_1 = arith.constant 0 : i32
    return %c0_i32, %c0_i32_0 : i32, i32
  }
  func.func @transform_3(%arg0: i32, %arg1: i32) -> (i32, i32) {
    %c0_i32 = arith.constant 0 : i32
    %c0_i32_0 = arith.constant 0 : i32
    %c0_i32_1 = arith.constant 0 : i32
    return %c0_i32, %c0_i32_0 : i32, i32
  }
  func.func @transform_4(%arg0: i32, %arg1: i32) -> (i32, i32, i32) {
    %c0_i32 = arith.constant 0 : i32
    %c0_i32_0 = arith.constant 0 : i32
    %c0_i32_1 = arith.constant 0 : i32
    return %arg0, %c0_i32, %c0_i32_0 : i32, i32, i32
  }
  func.func @transform_5(%arg0: i32, %arg1: i32) -> (i32, i32, i32) {
    %c0_i32 = arith.constant 0 : i32
    %c0_i32_0 = arith.constant 0 : i32
    %c0_i32_1 = arith.constant 0 : i32
    return %arg0, %c0_i32, %c0_i32_0 : i32, i32, i32
  }
}

module attributes {stable_mosaic.version = 11 : i64} {
  func.func @_apply_kernel(%arg0: i32, %arg1: i32, %arg2: memref<1x4x256xf32, #tpu.memory_space<vmem>>, %arg3: memref<32x4xf32, #tpu.memory_space<vmem>>, %arg4: memref<32x1xf32, #tpu.memory_space<vmem>>, %arg5: memref<4x32xf32, #tpu.memory_space<vmem>>, %arg6: memref<4x1xf32, #tpu.memory_space<vmem>>, %arg7: memref<1x4x256xf32, #tpu.memory_space<vmem>>) attributes {dimension_semantics = [#tpu.dimension_semantics<parallel>, #tpu.dimension_semantics<parallel>], iteration_bounds = array<i64: 2, 1>, scalar_prefetch = 0 : i64, scratch_operands = 0 : i64, tpu.core_type = #tpu.core_type<tc>, window_params = [{transform_indices = @transform_0, window_bounds = array<i64: 1, 4, 256>}, {pipeline_mode = #tpu.pipeline_mode<synchronous>, transform_indices = @transform_1, window_bounds = array<i64: 32, 4>}, {pipeline_mode = #tpu.pipeline_mode<synchronous>, transform_indices = @transform_2, window_bounds = array<i64: 32, 1>}, {pipeline_mode = #tpu.pipeline_mode<synchronous>, transform_indices = @transform_3, window_bounds = array<i64: 4, 32>}, {pipeline_mode = #tpu.pipeline_mode<synchronous>, transform_indices = @transform_4, window_bounds = array<i64: 4, 1>}, {transform_indices = @transform_5, window_bounds = array<i64: 1, 4, 256>}]} {
    %c0 = arith.constant 0 : index
    %c0_0 = arith.constant 0 : index
    %c0_1 = arith.constant 0 : index
    %0 = vector.load %arg2[%c0, %c0_0, %c0_1] : memref<1x4x256xf32, #tpu.memory_space<vmem>>, vector<1x4x256xf32>
    %1 = vector.shape_cast %0 : vector<1x4x256xf32> to vector<4x256xf32>
    %c0_2 = arith.constant 0 : index
    %c0_3 = arith.constant 0 : index
    %2 = vector.load %arg3[%c0_2, %c0_3] : memref<32x4xf32, #tpu.memory_space<vmem>>, vector<32x4xf32>
    %cst = arith.constant dense<0.000000e+00> : vector<32x256xf32>
    %3 = tpu.matmul %2, %1, %cst {dimension_numbers = #tpu.dot_dimension_numbers<[1], [0], [0], [1], [0, 0, 1, 1], [], []>} : vector<32x4xf32>, vector<4x256xf32>, vector<32x256xf32> -> vector<32x256xf32>
    %c0_4 = arith.constant 0 : index
    %c0_5 = arith.constant 0 : index
    %4 = vector.load %arg4[%c0_4, %c0_5] : memref<32x1xf32, #tpu.memory_space<vmem>>, vector<32x1xf32>
    %5 = vector.broadcast %4 : vector<32x1xf32> to vector<32x256xf32>
    %6 = arith.addf %3, %5 : vector<32x256xf32>
    %cst_6 = arith.constant 0.000000e+00 : f32
    %7 = vector.broadcast %cst_6 : f32 to vector<32x256xf32>
    %8 = arith.maximumf %6, %7 : vector<32x256xf32>
    %c0_7 = arith.constant 0 : index
    %c0_8 = arith.constant 0 : index
    %9 = vector.load %arg5[%c0_7, %c0_8] : memref<4x32xf32, #tpu.memory_space<vmem>>, vector<4x32xf32>
    %cst_9 = arith.constant dense<0.000000e+00> : vector<4x256xf32>
    %10 = tpu.matmul %9, %8, %cst_9 {dimension_numbers = #tpu.dot_dimension_numbers<[1], [0], [0], [1], [0, 0, 1, 1], [], []>} : vector<4x32xf32>, vector<32x256xf32>, vector<4x256xf32> -> vector<4x256xf32>
    %c0_10 = arith.constant 0 : index
    %c0_11 = arith.constant 0 : index
    %11 = vector.load %arg6[%c0_10, %c0_11] : memref<4x1xf32, #tpu.memory_space<vmem>>, vector<4x1xf32>
    %12 = vector.broadcast %11 : vector<4x1xf32> to vector<4x256xf32>
    %13 = arith.addf %10, %12 : vector<4x256xf32>
    %c0_12 = arith.constant 0 : index
    %c0_13 = arith.constant 0 : index
    %c0_14 = arith.constant 0 : index
    %14 = vector.load %arg7[%c0_12, %c0_13, %c0_14] : memref<1x4x256xf32, #tpu.memory_space<vmem>>, vector<1x4x256xf32>
    %15 = vector.shape_cast %14 : vector<1x4x256xf32> to vector<4x256xf32>
    %16 = vector.shape_cast %13 : vector<4x256xf32> to vector<1x4x256xf32>
    tpu.vector_store %arg7[%c0_12, %c0_13, %c0_14], %16 {strides = array<i32>} : memref<1x4x256xf32, #tpu.memory_space<vmem>>, vector<1x4x256xf32>,
    return
  }
  func.func @transform_0(%arg0: i32, %arg1: i32) -> (i32, i32, i32) {
    %c0_i32 = arith.constant 0 : i32
    %c0_i32_0 = arith.constant 0 : i32
    return %arg0, %c0_i32, %arg1 : i32, i32, i32
  }
  func.func @transform_1(%arg0: i32, %arg1: i32) -> (i32, i32) {
    %c0_i32 = arith.constant 0 : i32
    %c0_i32_0 = arith.constant 0 : i32
    %c0_i32_1 = arith.constant 0 : i32
    return %c0_i32, %c0_i32_0 : i32, i32
  }
  func.func @transform_2(%arg0: i32, %arg1: i32) -> (i32, i32) {
    %c0_i32 = arith.constant 0 : i32
    %c0_i32_0 = arith.constant 0 : i32
    %c0_i32_1 = arith.constant 0 : i32
    return %c0_i32, %c0_i32_0 : i32, i32
  }
  func.func @transform_3(%arg0: i32, %arg1: i32) -> (i32, i32) {
    %c0_i32 = arith.constant 0 : i32
    %c0_i32_0 = arith.constant 0 : i32
    %c0_i32_1 = arith.constant 0 : i32
    return %c0_i32, %c0_i32_0 : i32, i32
  }
  func.func @transform_4(%arg0: i32, %arg1: i32) -> (i32, i32) {
    %c0_i32 = arith.constant 0 : i32
    %c0_i32_0 = arith.constant 0 : i32
    %c0_i32_1 = arith.constant 0 : i32
    return %c0_i32, %c0_i32_0 : i32, i32
  }
  func.func @transform_5(%arg0: i32, %arg1: i32) -> (i32, i32, i32) {
    %c0_i32 = arith.constant 0 : i32
    %c0_i32_0 = arith.constant 0 : i32
    return %arg0, %c0_i32, %arg1 : i32, i32, i32
  }
}

</mosaic_0001>

<llo_original>
// kernel: channel_block_forward.3
$region0: #{channel_block_forward.3}
  #allocation0 [shape = 'u32[]', space=smem, size = 0x4, offset = 0x4, fixed_abs, tag = 'smem constant byte address 0x4 - core index']
  #allocation1 [shape = 'u32[72,128]{1,0:T(1,128)}', space=vmem, size = 0x9000, scoped, tag = 'internal scratch']
  %s0 = inlined_call_operand.vmem [shape: f32[2,4,256], index: 0, kind: input, shape index: {}]
  %s1 = inlined_call_operand.vmem [shape: f32[2,4,128], index: 1, kind: output, shape index: {0}]
  %s2 = inlined_call_operand.vmem [shape: f32[2,4,4], index: 2, kind: output, shape index: {1}]
  %3 = xla_tuple %s1, %s2
  %s4 = sld [smem:[#allocation0]]
  $region49: #{channel_block_forward.3} parent=0
    _
  %s6 = ssub.s32 1, %s4
  %s7 = scalar_select 0, %s6, %s4
  loop: start=0, step=1, limit=4
  $region2: #{channel_block_forward.3} parent=0 // loop_pre_header
    _
  $region3: #{channel_block_forward.3} parent=0 // loop_header
    %s9 = sphi 0, %s13
    %p10 = scmp.ge.s32.totalorder %s9, 4
    %s16 = sphi 0, %s28
    %s17 = sphi 0, %s24
    %s18 = sphi 0, %s16
    %s19 = sphi 0, %s17
    %s20 = sphi 0, %s18
    %s21 = sphi 0, %s19
    %s33 = sphi 0, %s35
    %s36 = sphi 0, %s33
    %s37 = sphi 0, %s36
    %s53 = sphi 0, %s37
    %s59 = sphi 0, %s61
    %s62 = sphi 0, %s59
    %s63 = sphi 0, %s62
    %s79 = sphi 0, %s63
    %s85 = sphi 0, %s87
    %s88 = sphi 0, %s85
    %s89 = sphi 0, %s88
    %s105 = sphi 0, %s89
  $region4: #{channel_block_forward.3} parent=0 // loop_header_branch
    %12 = sbr.rel (%p10) target = $region8
  $region5: #{channel_block_forward.3} parent=0 // loop_body
    %s14 = ssub.s32 %s9, 1
    %s15 = ssub.s32 %s9, 2
    %s22 = sadd.s32 1, %s17
    %p23 = scmp.ge.s32.totalorder %s22, 1
    %s24 = scalar_select %p23, 0, %s22
    %s25 = sadd.s32 1, %s16
    %s26 = scalar_select %p23, %s25, %s16
    %p27 = scmp.ge.s32.totalorder %s26, 2
    %s28 = scalar_select %p27, 0, %s26
    %s29 = ssub.s32 %s16, %s28
    %s30 = ssub.s32 %s17, %s24
    %s31 = sor.u32 %s29, %s30
    %p32 = scmp.eq.s32.totalorder %s31, 0
    %s34 = sadd.s32 %s33, 1
    %s35 = scalar_select %p32, %s33, %s34
    %p38 = pneg %p32
    %p39 = scmp.eq.s32.totalorder %s9, 1
    %p40 = por %p38, %p39
    %p41 = scmp.ne.s32.totalorder %s33, %s36
    %p42 = scmp.eq.s32.totalorder %s9, 0
    %p43 = por %p41, %p42
    %p44 = scmp.ne.s32.totalorder %s33, %s36
    %p45 = scmp.eq.s32.totalorder %s14, 1
    %p46 = por %p44, %p45
    %p47 = scmp.ne.s32.totalorder %s36, %s37
    %p48 = scmp.eq.s32.totalorder %s14, 0
    %p49 = por %p47, %p48
    %p50 = scmp.ne.s32.totalorder %s36, %s37
    %p51 = scmp.eq.s32.totalorder %s15, 1
    %p52 = por %p50, %p51
    %p54 = scmp.ne.s32.totalorder %s37, %s53
    %p55 = scmp.eq.s32.totalorder %s15, 0
    %p56 = por %p54, %p55
    %s57 = ssub.s32 %s16, %s28
    %p58 = scmp.eq.s32.totalorder %s57, 0
    %s60 = sadd.s32 %s59, 1
    %s61 = scalar_select %p58, %s59, %s60
    %p64 = pneg %p58
    %p65 = scmp.eq.s32.totalorder %s9, 1
    %p66 = por %p64, %p65
    %p67 = scmp.ne.s32.totalorder %s59, %s62
    %p68 = scmp.eq.s32.totalorder %s9, 0
    %p69 = por %p67, %p68
    %p70 = scmp.ne.s32.totalorder %s59, %s62
    %p71 = scmp.eq.s32.totalorder %s14, 1
    %p72 = por %p70, %p71
    %p73 = scmp.ne.s32.totalorder %s62, %s63
    %p74 = scmp.eq.s32.totalorder %s14, 0
    %p75 = por %p73, %p74
    %p76 = scmp.ne.s32.totalorder %s62, %s63
    %p77 = scmp.eq.s32.totalorder %s15, 1
    %p78 = por %p76, %p77
    %p80 = scmp.ne.s32.totalorder %s63, %s79
    %p81 = scmp.eq.s32.totalorder %s15, 0
    %p82 = por %p80, %p81
    %s83 = ssub.s32 %s16, %s28
    %p84 = scmp.eq.s32.totalorder %s83, 0
    %s86 = sadd.s32 %s85, 1
    %s87 = scalar_select %p84, %s85, %s86
    %p90 = pneg %p84
    %p91 = scmp.eq.s32.totalorder %s9, 1
    %p92 = por %p90, %p91
    %p93 = scmp.ne.s32.totalorder %s85, %s88
    %p94 = scmp.eq.s32.totalorder %s9, 0
    %p95 = por %p93, %p94
    %p96 = scmp.ne.s32.totalorder %s85, %s88
    %p97 = scmp.eq.s32.totalorder %s14, 1
    %p98 = por %p96, %p97
    %p99 = scmp.ne.s32.totalorder %s88, %s89
    %p100 = scmp.eq.s32.totalorder %s14, 0
    %p101 = por %p99, %p100
    %p102 = scmp.ne.s32.totalorder %s88, %s89
    %p103 = scmp.eq.s32.totalorder %s15, 1
    %p104 = por %p102, %p103
    %p106 = scmp.ne.s32.totalorder %s89, %s105
    %p107 = scmp.eq.s32.totalorder %s15, 0
    %p108 = por %p106, %p107
    %p109 = scmp.le.s32.totalorder 1, %s9
    %p110 = scmp.lt.s32.totalorder %s9, 3
    %p111 = pnand %p109, %p110
    %p112 = pneg %p111
    // Predicated region
    $region9: #{channel_block_forward.3} parent=5 // pred_check
      _
    $region10: #{channel_block_forward.3} parent=5 // pred_check_branch
      %114 = sbr.rel (%p111) target = $region12
    $region11: #{channel_block_forward.3} parent=5 // pred_region
      %s115 = ssub.s32 %s9, 1
    $region12: #{channel_block_forward.3} parent=5 // pred_fallthru
      _
    %p116 = scmp.lt.s32.totalorder %s9, 2
    // Predicated region
    $region13: #{channel_block_forward.3} parent=5 // pred_check
      %p117 = pneg %p116
    $region14: #{channel_block_forward.3} parent=5 // pred_check_branch
      %119 = sbr.rel (%p117) target = $region16
    $region15: #{channel_block_forward.3} parent=5 // pred_region
      // Predicated region
      $region17: #{channel_block_forward.3} parent=15 // pred_check
        %p120 = pneg %p43
      $region18: #{channel_block_forward.3} parent=15 // pred_check_branch
        %122 = sbr.rel (%p120) target = $region20
      $region19: #{channel_block_forward.3} parent=15 // pred_region
        %s123 = smul.u32 2, %s17
        %p124 = scmp.lt.s32.totalorder %s16, 1
        %s125 = scalar_select %p124, %s16, 1
        %p126 = scmp.lt.s32.totalorder %s123, 1
        %s127 = scalar_select %p126, %s123, 1
        %s128 = smul.addr %s125, 2
        %s129 = sadd.s32 %s127, %s128
        %s130 = smul.addr %s129, 4
        %s131 = scalar_lea.vmem %s0, %s130
        %s132 = smul.u32 2, %s17
      $region20: #{channel_block_forward.3} parent=15 // pred_fallthru
        _
    $region16: #{channel_block_forward.3} parent=5 // pred_fallthru
      _
    %p133 = scmp.le.s32.totalorder 1, %s9
    %p134 = scmp.lt.s32.totalorder %s9, 3
    %p135 = pnand %p133, %p134
    %p136 = pneg %p135
    // Predicated region
    $region21: #{channel_block_forward.3} parent=5 // pred_check
      _
    $region22: #{channel_block_forward.3} parent=5 // pred_check_branch
      %138 = sbr.rel (%p135) target = $region24
    $region23: #{channel_block_forward.3} parent=5 // pred_region
      %s139 = ssub.s32 %s9, 1
      %s140 = smul.u32 2, %s19
      %p141 = scmp.lt.s32.totalorder %s18, 1
      %s142 = scalar_select %p141, %s18, 1
      %p143 = scmp.lt.s32.totalorder %s140, 1
      %s144 = scalar_select %p143, %s140, 1
      %s145 = smul.addr %s142, 2
      %s146 = sadd.s32 %s144, %s145
      %s147 = smul.addr %s146, 4
      %s148 = scalar_lea.vmem %s0, %s147
      %p149 = pneg %p49
      %p150 = pneg %p46
      %p151 = pneg %p75
      %p152 = pneg %p72
      %p153 = scmp.lt.s32.totalorder %s18, 1
      %s154 = scalar_select %p153, %s18, 1
      %s155 = smul.addr %s154, 4
      %s156 = scalar_lea.vmem %s1, %s155
      %p157 = pneg %p101
      %p158 = pneg %p98
      %p159 = scmp.lt.s32.totalorder %s18, 1
      %s160 = scalar_select %p159, %s18, 1
      %s161 = smul.addr %s160, 4
      %s162 = scalar_lea.vmem %s2, %s161
      %s163 = smul.u32 2, %s19
      %p164 = scmp.lt.s32.totalorder %s18, 1
      %s165 = scalar_select %p164, %s18, 1
      %p166 = scmp.lt.s32.totalorder %s163, 1
      %s167 = scalar_select %p166, %s163, 1
      %s168 = smul.addr %s165, 2
      %s169 = sadd.s32 %s167, %s168
      %s170 = smul.addr %s169, 4
      %s171 = scalar_lea.vmem %s0, %s170
      %s172 = smul.u32 2, %s19
      %p173 = scmp.lt.s32.totalorder %s18, 1
      %s174 = scalar_select %p173, %s18, 1
      %s175 = smul.addr %s174, 4
      %s176 = scalar_lea.vmem %s1, %s175
      %p177 = scmp.lt.s32.totalorder %s18, 1
      %s178 = scalar_select %p177, %s18, 1
      %s179 = smul.addr %s178, 4
      %s180 = scalar_lea.vmem %s2, %s179
      %p181 = scmp.eq.s32.totalorder %s19, 0
      // Predicated region
      $region25: #{channel_block_forward.3} parent=23 // pred_check
        %p182 = pneg %p181
      $region26: #{channel_block_forward.3} parent=23 // pred_check_branch
        %184 = sbr.rel (%p182) target = $region28
      $region27: #{channel_block_forward.3} parent=23 // pred_region
        %185 = vst [vmem:[%s176] sm:$0xf] 0.0
        %vm186 = vcmask 27648
        %187 = vst.msk [vmem:[%s180] sm:$0xf] %vm186, 0.0
      $region28: #{channel_block_forward.3} parent=23 // pred_fallthru
        _
      %v188 = vld [vmem:[%s171] sm:$0xff]
      %v189 = vld [vmem:[%s176] sm:$0xf]
      %v191 = vrot.slane %v188, 4
      %v193 = vunpack.c.l.s4 1983009808
      %v194 = vunpack.c.0.s8 %v193
      %v195 = vperm.slane %v188, %v194
      %v198 = vunpack.c.l.s4 1983009808
      %v199 = vunpack.c.0.s8 %v198
      %v200 = vperm.slane %v191, %v199
      %v201 = vrot.slane %v200, 4
      %vm202 = vcmask 1047556
      %v203 = vsel %vm202, %v201, %v195
      %v204 = vrot.slane %v195, 4
      %v205 = vsel %vm202, %v200, %v204
      %v207 = vunpack.c.l.s4 1934713408
      %v208 = vunpack.c.0.s8 %v207
      %v209 = vperm.slane %v203, %v208
      %v211 = vunpack.c.l.s4 1934713408
      %v212 = vunpack.c.0.s8 %v211
      %v213 = vperm.slane %v205, %v212
      %v214 = vrot.slane %v209, 4
      %v215 = vsel %vm202, 0.0, %v214
      %v216 = vrot.slane %v213, 4
      %v217 = vsel %vm202, 0.0, %v216
      %vm218 = vcmask 1041408
      %v219 = vsel %vm218, %v209, 0.0
      %v220 = vrot.slane %v219, 4
      %v221 = vadd.f32 %v219, %v220
      %v222 = vrot.slane %v221, 2
      %v223 = vadd.f32 %v221, %v222
      %v224 = vrot.slane %v223, 1
      %v225 = vadd.f32 %v223, %v224
      %v226 = vsel %vm218, %v215, 0.0
      %v227 = vrot.slane %v226, 4
      %v228 = vadd.f32 %v226, %v227
      %v229 = vrot.slane %v228, 2
      %v230 = vadd.f32 %v228, %v229
      %v231 = vrot.slane %v230, 1
      %v232 = vadd.f32 %v230, %v231
      %v233 = vsel %vm218, %v213, 0.0
      %v234 = vrot.slane %v233, 4
      %v235 = vadd.f32 %v233, %v234
      %v236 = vrot.slane %v235, 2
      %v237 = vadd.f32 %v235, %v236
      %v238 = vrot.slane %v237, 1
      %v239 = vadd.f32 %v237, %v238
      %v240 = vsel %vm218, %v217, 0.0
      %v241 = vrot.slane %v240, 4
      %v242 = vadd.f32 %v240, %v241
      %v243 = vrot.slane %v242, 2
      %v244 = vadd.f32 %v242, %v243
      %v245 = vrot.slane %v244, 1
      %v246 = vadd.f32 %v244, %v245
      %vm251 = vcmask 1041409
      %v252 = vsel %vm251, %v232, %v225
      %vm253 = vcmask 1042434
      %v254 = vsel %vm253, %v239, %v252
      %vm255 = vcmask 1043459
      %v256 = vsel %vm255, %v246, %v254
      %v258 = vadd.f32 %v189, %v256
      %259 = vst [vmem:[%s176] sm:$0xf] %v258
      %v260 = vld [vmem:[%s180] sm:$0xf]
      %261 = vst [vmem:[#allocation1] ss:$2 sm:$0xff] %v188
      %v262 = vld.sshfl [vmem:[#allocation1] sm:$0xff pattern:$0x75316420]
      %v263 = vld.sshfl [vmem:[#allocation1 + $0x8] sm:$0xff pattern:$0x75316420]
      %266 = vst [vmem:[#allocation1] ss:$2 sm:$0xff] %v188
      %v267 = vld.sshfl [vmem:[#allocation1] sm:$0xff pattern:$0x75316420]
      %v268 = vld.sshfl [vmem:[#allocation1 + $0x8] sm:$0xff pattern:$0x75316420]
      %271 = vmatpush.xpose.msra.mxu0 0.0
      %272 = vmatpush.xpose.msra.mxu0 0.0
      %273 = vmatpush.xpose.msra.mxu0 0.0
      %274 = vmatpush.xpose.msra.mxu0 0.0
      %275 = vmatpush.xpose.msra.mxu0 0.0
      %276 = vmatpush.xpose.msra.mxu0 0.0
      %277 = vmatpush.xpose.msra.mxu0 0.0
      %278 = vmatpush.xpose.msra.mxu0 0.0
      %279 = vmatpush.xpose.msra.mxu0 0.0
      %280 = vmatpush.xpose.msra.mxu0 0.0
      %281 = vmatpush.xpose.msra.mxu0 0.0
      %282 = vmatpush.xpose.msra.mxu0 0.0
      %283 = vmatpush.xpose.msra.mxu0 0.0
      %284 = vmatpush.xpose.msra.mxu0 0.0
      %285 = vmatpush.xpose.msra.mxu0 0.0
      %286 = vmatpush.xpose.msra.mxu0 %v267
      %287 = vmatmul.f32.gmra.mxu0 %v262
      %v288 = vpop.f32.mrf.mxu0
      %v289 = vadd.f32 0.0, %v288
      %290 = vdwg.mxu0
      %291 = vmatpush.xpose.msra.mxu0 0.0
      %292 = vmatpush.xpose.msra.mxu0 0.0
      %293 = vmatpush.xpose.msra.mxu0 0.0
      %294 = vmatpush.xpose.msra.mxu0 0.0
      %295 = vmatpush.xpose.msra.mxu0 0.0
      %296 = vmatpush.xpose.msra.mxu0 0.0
      %297 = vmatpush.xpose.msra.mxu0 0.0
      %298 = vmatpush.xpose.msra.mxu0 0.0
      %299 = vmatpush.xpose.msra.mxu0 0.0
      %300 = vmatpush.xpose.msra.mxu0 0.0
      %301 = vmatpush.xpose.msra.mxu0 0.0
      %302 = vmatpush.xpose.msra.mxu0 0.0
      %303 = vmatpush.xpose.msra.mxu0 0.0
      %304 = vmatpush.xpose.msra.mxu0 0.0
      %305 = vmatpush.xpose.msra.mxu0 0.0
      %306 = vmatpush.xpose.msra.mxu0 %v268
      %307 = vmatmul.f32.gmra.mxu0 %v263
      %v308 = vpop.f32.mrf.mxu0
      %v309 = vadd.f32 %v289, %v308
      %310 = vdwg.mxu0
      %v311 = vadd.f32 %v260, %v309
      %vm312 = vcmask 27648
      %313 = vst.msk [vmem:[%s180] sm:$0xf] %vm312, %v311
      %p314 = scmp.lt.s32.totalorder %s18, 1
      %s315 = scalar_select %p314, %s18, 1
      %s316 = smul.addr %s315, 4
      %s317 = scalar_lea.vmem %s1, %s316
      %p318 = scmp.lt.s32.totalorder %s18, 1
      %s319 = scalar_select %p318, %s18, 1
      %s320 = smul.addr %s319, 4
      %s321 = scalar_lea.vmem %s2, %s320
      // Predicated region
      $region29: #{channel_block_forward.3} parent=23 // pred_check
        %p322 = pneg %p72
      $region30: #{channel_block_forward.3} parent=23 // pred_check_branch
        %324 = sbr.rel (%p322) target = $region32
      $region31: #{channel_block_forward.3} parent=23 // pred_region
        _
      $region32: #{channel_block_forward.3} parent=23 // pred_fallthru
        _
      // Predicated region
      $region33: #{channel_block_forward.3} parent=23 // pred_check
        %p325 = pneg %p98
      $region34: #{channel_block_forward.3} parent=23 // pred_check_branch
        %327 = sbr.rel (%p325) target = $region36
      $region35: #{channel_block_forward.3} parent=23 // pred_region
        _
      $region36: #{channel_block_forward.3} parent=23 // pred_fallthru
        _
    $region24: #{channel_block_forward.3} parent=5 // pred_fallthru
      _
    %p328 = scmp.le.s32.totalorder 2, %s9
    // Predicated region
    $region37: #{channel_block_forward.3} parent=5 // pred_check
      %p329 = pneg %p328
    $region38: #{channel_block_forward.3} parent=5 // pred_check_branch
      %331 = sbr.rel (%p329) target = $region40
    $region39: #{channel_block_forward.3} parent=5 // pred_region
      %s332 = ssub.s32 %s9, 2
      // Predicated region
      $region41: #{channel_block_forward.3} parent=39 // pred_check
        %p333 = pneg %p78
      $region42: #{channel_block_forward.3} parent=39 // pred_check_branch
        %335 = sbr.rel (%p333) target = $region44
      $region43: #{channel_block_forward.3} parent=39 // pred_region
        %p336 = scmp.lt.s32.totalorder %s20, 1
        %s337 = scalar_select %p336, %s20, 1
        %s338 = smul.addr %s337, 4
        %s339 = scalar_lea.vmem %s1, %s338
      $region44: #{channel_block_forward.3} parent=39 // pred_fallthru
        _
      // Predicated region
      $region45: #{channel_block_forward.3} parent=39 // pred_check
        %p340 = pneg %p104
      $region46: #{channel_block_forward.3} parent=39 // pred_check_branch
        %342 = sbr.rel (%p340) target = $region48
      $region47: #{channel_block_forward.3} parent=39 // pred_region
        %p343 = scmp.lt.s32.totalorder %s20, 1
        %s344 = scalar_select %p343, %s20, 1
        %s345 = smul.addr %s344, 4
        %s346 = scalar_lea.vmem %s2, %s345
      $region48: #{channel_block_forward.3} parent=39 // pred_fallthru
        _
    $region40: #{channel_block_forward.3} parent=5 // pred_fallthru
      _
  $region6: #{channel_block_forward.3} parent=0 // loop_footer
    %s13 = sadd.s32 1, %s9
  $region7: #{channel_block_forward.3} parent=0 // loop_footer_branch
    %8 = sbr.rel target = $region3
  $region8: #{channel_block_forward.3} parent=0 // loop_exit
    _

// kernel: channel_block_forward.4
$region0: #{channel_block_forward.4}
  #allocation0 [shape = 'u32[]', space=smem, size = 0x4, offset = 0x4, fixed_abs, tag = 'smem constant byte address 0x4 - core index']
  #allocation1 [shape = 'u32[72,128]{1,0:T(1,128)}', space=vmem, size = 0x9000, scoped, tag = 'internal scratch']
  %s0 = inlined_call_operand.vmem [shape: f32[2,4,256], index: 0, kind: input, shape index: {}]
  %s1 = inlined_call_operand.vmem [shape: f32[32,4], index: 1, kind: input, shape index: {}]
  %s2 = inlined_call_operand.vmem [shape: f32[32,1], index: 2, kind: input, shape index: {}]
  %s3 = inlined_call_operand.vmem [shape: f32[4,32], index: 3, kind: input, shape index: {}]
  %s4 = inlined_call_operand.vmem [shape: f32[2,4,128], index: 4, kind: output, shape index: {0}]
  %s5 = inlined_call_operand.vmem [shape: f32[2,4,128], index: 5, kind: output, shape index: {1}]
  %6 = xla_tuple %s4, %s5
  %s7 = sld [smem:[#allocation0]]
  $region61: #{channel_block_forward.4} parent=0
    _
  %s9 = ssub.s32 1, %s7
  %s10 = scalar_select 0, %s9, %s7
  loop: start=0, step=1, limit=4
  $region2: #{channel_block_forward.4} parent=0 // loop_pre_header
    _
  $region3: #{channel_block_forward.4} parent=0 // loop_header
    %s12 = sphi 0, %s16
    %p13 = scmp.ge.s32.totalorder %s12, 4
    %s19 = sphi 0, %s31
    %s20 = sphi 0, %s27
    %s21 = sphi 0, %s19
    %s22 = sphi 0, %s20
    %s23 = sphi 0, %s21
    %s24 = sphi 0, %s22
    %s36 = sphi 0, %s38
    %s39 = sphi 0, %s36
    %s40 = sphi 0, %s39
    %s56 = sphi 0, %s40
    %s60 = sphi 0, %s60
    %s62 = sphi 0, %s60
    %s63 = sphi 0, %s62
    %s77 = sphi 0, %s63
    %s81 = sphi 0, %s81
    %s83 = sphi 0, %s81
    %s84 = sphi 0, %s83
    %s98 = sphi 0, %s84
    %s102 = sphi 0, %s102
    %s104 = sphi 0, %s102
    %s105 = sphi 0, %s104
    %s119 = sphi 0, %s105
    %s125 = sphi 0, %s127
    %s128 = sphi 0, %s125
    %s129 = sphi 0, %s128
    %s145 = sphi 0, %s129
    %s151 = sphi 0, %s153
    %s154 = sphi 0, %s151
    %s155 = sphi 0, %s154
    %s171 = sphi 0, %s155
  $region4: #{channel_block_forward.4} parent=0 // loop_header_branch
    %15 = sbr.rel (%p13) target = $region8
  $region5: #{channel_block_forward.4} parent=0 // loop_body
    %s17 = ssub.s32 %s12, 1
    %s18 = ssub.s32 %s12, 2
    %s25 = sadd.s32 1, %s20
    %p26 = scmp.ge.s32.totalorder %s25, 1
    %s27 = scalar_select %p26, 0, %s25
    %s28 = sadd.s32 1, %s19
    %s29 = scalar_select %p26, %s28, %s19
    %p30 = scmp.ge.s32.totalorder %s29, 2
    %s31 = scalar_select %p30, 0, %s29
    %s32 = ssub.s32 %s19, %s31
    %s33 = ssub.s32 %s20, %s27
    %s34 = sor.u32 %s32, %s33
    %p35 = scmp.eq.s32.totalorder %s34, 0
    %s37 = sadd.s32 %s36, 1
    %s38 = scalar_select %p35, %s36, %s37
    %p41 = pneg %p35
    %p42 = scmp.eq.s32.totalorder %s12, 1
    %p43 = por %p41, %p42
    %p44 = scmp.ne.s32.totalorder %s36, %s39
    %p45 = scmp.eq.s32.totalorder %s12, 0
    %p46 = por %p44, %p45
    %p47 = scmp.ne.s32.totalorder %s36, %s39
    %p48 = scmp.eq.s32.totalorder %s17, 1
    %p49 = por %p47, %p48
    %p50 = scmp.ne.s32.totalorder %s39, %s40
    %p51 = scmp.eq.s32.totalorder %s17, 0
    %p52 = por %p50, %p51
    %p53 = scmp.ne.s32.totalorder %s39, %s40
    %p54 = scmp.eq.s32.totalorder %s18, 1
    %p55 = por %p53, %p54
    %p57 = scmp.ne.s32.totalorder %s40, %s56
    %p58 = scmp.eq.s32.totalorder %s18, 0
    %p59 = por %p57, %p58
    %s61 = sadd.s32 %s60, 1
    %p64 = scmp.eq.s32.totalorder %s12, 1
    %p65 = scmp.ne.s32.totalorder %s60, %s62
    %p66 = scmp.eq.s32.totalorder %s12, 0
    %p67 = por %p65, %p66
    %p68 = scmp.ne.s32.totalorder %s60, %s62
    %p69 = scmp.eq.s32.totalorder %s17, 1
    %p70 = por %p68, %p69
    %p71 = scmp.ne.s32.totalorder %s62, %s63
    %p72 = scmp.eq.s32.totalorder %s17, 0
    %p73 = por %p71, %p72
    %p74 = scmp.ne.s32.totalorder %s62, %s63
    %p75 = scmp.eq.s32.totalorder %s18, 1
    %p76 = por %p74, %p75
    %p78 = scmp.ne.s32.totalorder %s63, %s77
    %p79 = scmp.eq.s32.totalorder %s18, 0
    %p80 = por %p78, %p79
    %s82 = sadd.s32 %s81, 1
    %p85 = scmp.eq.s32.totalorder %s12, 1
    %p86 = scmp.ne.s32.totalorder %s81, %s83
    %p87 = scmp.eq.s32.totalorder %s12, 0
    %p88 = por %p86, %p87
    %p89 = scmp.ne.s32.totalorder %s81, %s83
    %p90 = scmp.eq.s32.totalorder %s17, 1
    %p91 = por %p89, %p90
    %p92 = scmp.ne.s32.totalorder %s83, %s84
    %p93 = scmp.eq.s32.totalorder %s17, 0
    %p94 = por %p92, %p93
    %p95 = scmp.ne.s32.totalorder %s83, %s84
    %p96 = scmp.eq.s32.totalorder %s18, 1
    %p97 = por %p95, %p96
    %p99 = scmp.ne.s32.totalorder %s84, %s98
    %p100 = scmp.eq.s32.totalorder %s18, 0
    %p101 = por %p99, %p100
    %s103 = sadd.s32 %s102, 1
    %p106 = scmp.eq.s32.totalorder %s12, 1
    %p107 = scmp.ne.s32.totalorder %s102, %s104
    %p108 = scmp.eq.s32.totalorder %s12, 0
    %p109 = por %p107, %p108
    %p110 = scmp.ne.s32.totalorder %s102, %s104
    %p111 = scmp.eq.s32.totalorder %s17, 1
    %p112 = por %p110, %p111
    %p113 = scmp.ne.s32.totalorder %s104, %s105
    %p114 = scmp.eq.s32.totalorder %s17, 0
    %p115 = por %p113, %p114
    %p116 = scmp.ne.s32.totalorder %s104, %s105
    %p117 = scmp.eq.s32.totalorder %s18, 1
    %p118 = por %p116, %p117
    %p120 = scmp.ne.s32.totalorder %s105, %s119
    %p121 = scmp.eq.s32.totalorder %s18, 0
    %p122 = por %p120, %p121
    %s123 = ssub.s32 %s19, %s31
    %p124 = scmp.eq.s32.totalorder %s123, 0
    %s126 = sadd.s32 %s125, 1
    %s127 = scalar_select %p124, %s125, %s126
    %p130 = pneg %p124
    %p131 = scmp.eq.s32.totalorder %s12, 1
    %p132 = por %p130, %p131
    %p133 = scmp.ne.s32.totalorder %s125, %s128
    %p134 = scmp.eq.s32.totalorder %s12, 0
    %p135 = por %p133, %p134
    %p136 = scmp.ne.s32.totalorder %s125, %s128
    %p137 = scmp.eq.s32.totalorder %s17, 1
    %p138 = por %p136, %p137
    %p139 = scmp.ne.s32.totalorder %s128, %s129
    %p140 = scmp.eq.s32.totalorder %s17, 0
    %p141 = por %p139, %p140
    %p142 = scmp.ne.s32.totalorder %s128, %s129
    %p143 = scmp.eq.s32.totalorder %s18, 1
    %p144 = por %p142, %p143
    %p146 = scmp.ne.s32.totalorder %s129, %s145
    %p147 = scmp.eq.s32.totalorder %s18, 0
    %p148 = por %p146, %p147
    %s149 = ssub.s32 %s19, %s31
    %p150 = scmp.eq.s32.totalorder %s149, 0
    %s152 = sadd.s32 %s151, 1
    %s153 = scalar_select %p150, %s151, %s152
    %p156 = pneg %p150
    %p157 = scmp.eq.s32.totalorder %s12, 1
    %p158 = por %p156, %p157
    %p159 = scmp.ne.s32.totalorder %s151, %s154
    %p160 = scmp.eq.s32.totalorder %s12, 0
    %p161 = por %p159, %p160
    %p162 = scmp.ne.s32.totalorder %s151, %s154
    %p163 = scmp.eq.s32.totalorder %s17, 1
    %p164 = por %p162, %p163
    %p165 = scmp.ne.s32.totalorder %s154, %s155
    %p166 = scmp.eq.s32.totalorder %s17, 0
    %p167 = por %p165, %p166
    %p168 = scmp.ne.s32.totalorder %s154, %s155
    %p169 = scmp.eq.s32.totalorder %s18, 1
    %p170 = por %p168, %p169
    %p172 = scmp.ne.s32.totalorder %s155, %s171
    %p173 = scmp.eq.s32.totalorder %s18, 0
    %p174 = por %p172, %p173
    %p175 = scmp.le.s32.totalorder 1, %s12
    %p176 = scmp.lt.s32.totalorder %s12, 3
    %p177 = pnand %p175, %p176
    %p178 = pneg %p177
    // Predicated region
    $region9: #{channel_block_forward.4} parent=5 // pred_check
      _
    $region10: #{channel_block_forward.4} parent=5 // pred_check_branch
      %180 = sbr.rel (%p177) target = $region12
    $region11: #{channel_block_forward.4} parent=5 // pred_region
      %s181 = ssub.s32 %s12, 1
      // Predicated region
      $region13: #{channel_block_forward.4} parent=11 // pred_check
        %p182 = pneg %p73
      $region14: #{channel_block_forward.4} parent=11 // pred_check_branch
        %184 = sbr.rel (%p182) target = $region16
      $region15: #{channel_block_forward.4} parent=11 // pred_region
        _
      $region16: #{channel_block_forward.4} parent=11 // pred_fallthru
        _
      // Predicated region
      $region17: #{channel_block_forward.4} parent=11 // pred_check
        %p185 = pneg %p94
      $region18: #{channel_block_forward.4} parent=11 // pred_check_branch
        %187 = sbr.rel (%p185) target = $region20
      $region19: #{channel_block_forward.4} parent=11 // pred_region
        _
      $region20: #{channel_block_forward.4} parent=11 // pred_fallthru
        _
      // Predicated region
      $region21: #{channel_block_forward.4} parent=11 // pred_check
        %p188 = pneg %p115
      $region22: #{channel_block_forward.4} parent=11 // pred_check_branch
        %190 = sbr.rel (%p188) target = $region24
      $region23: #{channel_block_forward.4} parent=11 // pred_region
        _
      $region24: #{channel_block_forward.4} parent=11 // pred_fallthru
        _
    $region12: #{channel_block_forward.4} parent=5 // pred_fallthru
      _
    %p191 = scmp.lt.s32.totalorder %s12, 2
    // Predicated region
    $region25: #{channel_block_forward.4} parent=5 // pred_check
      %p192 = pneg %p191
    $region26: #{channel_block_forward.4} parent=5 // pred_check_branch
      %194 = sbr.rel (%p192) target = $region28
    $region27: #{channel_block_forward.4} parent=5 // pred_region
      // Predicated region
      $region29: #{channel_block_forward.4} parent=27 // pred_check
        %p195 = pneg %p46
      $region30: #{channel_block_forward.4} parent=27 // pred_check_branch
        %197 = sbr.rel (%p195) target = $region32
      $region31: #{channel_block_forward.4} parent=27 // pred_region
        %s198 = smul.u32 2, %s20
        %p199 = scmp.lt.s32.totalorder %s19, 1
        %s200 = scalar_select %p199, %s19, 1
        %p201 = scmp.lt.s32.totalorder %s198, 1
        %s202 = scalar_select %p201, %s198, 1
        %s203 = smul.addr %s200, 2
        %s204 = sadd.s32 %s202, %s203
        %s205 = smul.addr %s204, 4
        %s206 = scalar_lea.vmem %s0, %s205
        %s207 = smul.u32 2, %s20
      $region32: #{channel_block_forward.4} parent=27 // pred_fallthru
        _
    $region28: #{channel_block_forward.4} parent=5 // pred_fallthru
      _
    %p208 = scmp.le.s32.totalorder 1, %s12
    %p209 = scmp.lt.s32.totalorder %s12, 3
    %p210 = pnand %p208, %p209
    %p211 = pneg %p210
    // Predicated region
    $region33: #{channel_block_forward.4} parent=5 // pred_check
      _
    $region34: #{channel_block_forward.4} parent=5 // pred_check_branch
      %213 = sbr.rel (%p210) target = $region36
    $region35: #{channel_block_forward.4} parent=5 // pred_region
      %s214 = ssub.s32 %s12, 1
      %s215 = smul.u32 2, %s22
      %p216 = scmp.lt.s32.totalorder %s21, 1
      %s217 = scalar_select %p216, %s21, 1
      %p218 = scmp.lt.s32.totalorder %s215, 1
      %s219 = scalar_select %p218, %s215, 1
      %s220 = smul.addr %s217, 2
      %s221 = sadd.s32 %s219, %s220
      %s222 = smul.addr %s221, 4
      %s223 = scalar_lea.vmem %s0, %s222
      %p224 = pneg %p52
      %p225 = pneg %p49
      %p226 = pneg %p73
      %p227 = pneg %p70
      %p228 = pneg %p94
      %p229 = pneg %p91
      %p230 = pneg %p115
      %p231 = pneg %p112
      %p232 = pneg %p141
      %p233 = pneg %p138
      %p234 = scmp.lt.s32.totalorder %s21, 1
      %s235 = scalar_select %p234, %s21, 1
      %s236 = smul.addr %s235, 4
      %s237 = scalar_lea.vmem %s4, %s236
      %p238 = pneg %p167
      %p239 = pneg %p164
      %p240 = scmp.lt.s32.totalorder %s21, 1
      %s241 = scalar_select %p240, %s21, 1
      %s242 = smul.addr %s241, 4
      %s243 = scalar_lea.vmem %s5, %s242
      %s244 = smul.u32 2, %s22
      %p245 = scmp.lt.s32.totalorder %s21, 1
      %s246 = scalar_select %p245, %s21, 1
      %p247 = scmp.lt.s32.totalorder %s244, 1
      %s248 = scalar_select %p247, %s244, 1
      %s249 = smul.addr %s246, 2
      %s250 = sadd.s32 %s248, %s249
      %s251 = smul.addr %s250, 4
      %s252 = scalar_lea.vmem %s0, %s251
      %s253 = smul.u32 2, %s22
      %p254 = scmp.lt.s32.totalorder %s21, 1
      %s255 = scalar_select %p254, %s21, 1
      %s256 = smul.addr %s255, 4
      %s257 = scalar_lea.vmem %s4, %s256
      %p258 = scmp.lt.s32.totalorder %s21, 1
      %s259 = scalar_select %p258, %s21, 1
      %s260 = smul.addr %s259, 4
      %s261 = scalar_lea.vmem %s5, %s260
      %p262 = scmp.eq.s32.totalorder %s22, 0
      // Predicated region
      $region37: #{channel_block_forward.4} parent=35 // pred_check
        %p263 = pneg %p262
      $region38: #{channel_block_forward.4} parent=35 // pred_check_branch
        %265 = sbr.rel (%p263) target = $region40
      $region39: #{channel_block_forward.4} parent=35 // pred_region
        %266 = vst [vmem:[%s257] sm:$0xf] 0.0
        %267 = vst [vmem:[%s261] sm:$0xf] 0.0
      $region40: #{channel_block_forward.4} parent=35 // pred_fallthru
        _
      %v268 = vld [vmem:[%s252] sm:$0xff]
      %v269 = vld [vmem:[%s1] sm:$0xff]
      %v270 = vld [vmem:[%s1 + $0x8] sm:$0xff]
      %v271 = vld [vmem:[%s1 + $0x10] sm:$0xff]
      %v272 = vld [vmem:[%s1 + $0x18] sm:$0xff]
      %v273 = vld [vmem:[%s2] sm:$0xff]
      %v274 = vld [vmem:[%s2 + $0x8] sm:$0xff]
      %v275 = vld [vmem:[%s2 + $0x10] sm:$0xff]
      %v276 = vld [vmem:[%s2 + $0x18] sm:$0xff]
      %278 = vset.pattern.permute.xlu0 0
      %279 = vperm.xlu0 %278, %v273
      %v280 = vpop.permute.xlu0 %279
      %283 = vset.pattern.permute.xlu0 0
      %284 = vperm.xlu0 %283, %v274
      %v285 = vpop.permute.xlu0 %284
      %288 = vset.pattern.permute.xlu0 0
      %289 = vperm.xlu0 %288, %v275
      %v290 = vpop.permute.xlu0 %289
      %293 = vset.pattern.permute.xlu0 0
      %294 = vperm.xlu0 %293, %v276
      %v295 = vpop.permute.xlu0 %294
      %298 = vst [vmem:[#allocation1] ss:$2 sm:$0xff] %v268
      %v299 = vld.sshfl [vmem:[#allocation1] sm:$0xff pattern:$0x75316420]
      %v300 = vld.sshfl [vmem:[#allocation1 + $0x8] sm:$0xff pattern:$0x75316420]
      %vm301 = vcmask 31744
      %v303 = vsel %vm301, %v269, 0
      %v306 = vsel %vm301, %v270, 0
      %v309 = vsel %vm301, %v271, 0
      %v312 = vsel %vm301, %v272, 0
      %vm314 = vcmask 1043456
      %v315 = vsel %vm314, %v299, 0
      %v317 = vsel %vm314, %v300, 0
      %319 = vmatpush.msra.mxu0 0.0
      %320 = vmatpush.msra.mxu0 0.0
      %321 = vmatpush.msra.mxu0 0.0
      %322 = vmatpush.msra.mxu0 0.0
      %323 = vmatpush.msra.mxu0 0.0
      %324 = vmatpush.msra.mxu0 0.0
      %325 = vmatpush.msra.mxu0 0.0
      %326 = vmatpush.msra.mxu0 0.0
      %327 = vmatpush.msra.mxu0 0.0
      %328 = vmatpush.msra.mxu0 0.0
      %329 = vmatpush.msra.mxu0 0.0
      %330 = vmatpush.msra.mxu0 0.0
      %331 = vmatpush.msra.mxu0 0.0
      %332 = vmatpush.msra.mxu0 0.0
      %333 = vmatpush.msra.mxu0 0.0
      %334 = vmatpush.msra.mxu0 %v315
      %335 = vmatmul.f32.gmra.mxu0 %v303
      %v336 = vpop.f32.mrf.mxu0
      %v337 = vadd.f32 %v280, %v336
      %338 = vmatmul.f32.gmra.mxu0 %v306
      %v339 = vpop.f32.mrf.mxu0
      %v340 = vadd.f32 %v285, %v339
      %341 = vmatmul.f32.gmra.mxu0 %v309
      %v342 = vpop.f32.mrf.mxu0
      %v343 = vadd.f32 %v290, %v342
      %344 = vmatmul.f32.gmra.mxu0 %v312
      %v345 = vpop.f32.mrf.mxu0
      %v346 = vadd.f32 %v295, %v345
      %347 = vdwg.mxu0
      %348 = vmatpush.msra.mxu0 0.0
      %349 = vmatpush.msra.mxu0 0.0
      %350 = vmatpush.msra.mxu0 0.0
      %351 = vmatpush.msra.mxu0 0.0
      %352 = vmatpush.msra.mxu0 0.0
      %353 = vmatpush.msra.mxu0 0.0
      %354 = vmatpush.msra.mxu0 0.0
      %355 = vmatpush.msra.mxu0 0.0
      %356 = vmatpush.msra.mxu0 0.0
      %357 = vmatpush.msra.mxu0 0.0
      %358 = vmatpush.msra.mxu0 0.0
      %359 = vmatpush.msra.mxu0 0.0
      %360 = vmatpush.msra.mxu0 0.0
      %361 = vmatpush.msra.mxu0 0.0
      %362 = vmatpush.msra.mxu0 0.0
      %363 = vmatpush.msra.mxu0 %v317
      %364 = vmatmul.f32.gmra.mxu0 %v303
      %v365 = vpop.f32.mrf.mxu0
      %v366 = vadd.f32 %v280, %v365
      %367 = vmatmul.f32.gmra.mxu0 %v306
      %v368 = vpop.f32.mrf.mxu0
      %v369 = vadd.f32 %v285, %v368
      %370 = vmatmul.f32.gmra.mxu0 %v309
      %v371 = vpop.f32.mrf.mxu0
      %v372 = vadd.f32 %v290, %v371
      %373 = vmatmul.f32.gmra.mxu0 %v312
      %v374 = vpop.f32.mrf.mxu0
      %v375 = vadd.f32 %v295, %v374
      %376 = vdwg.mxu0
      %v377 = vmax.f32 %v337, 0.0
      %v378 = vmax.f32 %v366, 0.0
      %v379 = vmax.f32 %v340, 0.0
      %v380 = vmax.f32 %v369, 0.0
      %v381 = vmax.f32 %v343, 0.0
      %v382 = vmax.f32 %v372, 0.0
      %v383 = vmax.f32 %v346, 0.0
      %v384 = vmax.f32 %v375, 0.0
      %v385 = vld [vmem:[%s3] sm:$0xf]
      %vm386 = vcmask 261120
      %v388 = vsel %vm386, %v385, 0
      %390 = vmatpush.msra.mxu0 0.0
      %391 = vmatpush.msra.mxu0 0.0
      %392 = vmatpush.msra.mxu0 0.0
      %393 = vmatpush.msra.mxu0 0.0
      %394 = vmatpush.msra.mxu0 0.0
      %395 = vmatpush.msra.mxu0 0.0
      %396 = vmatpush.msra.mxu0 0.0
      %397 = vmatpush.msra.mxu0 0.0
      %398 = vmatpush.msra.mxu0 0.0
      %399 = vmatpush.msra.mxu0 0.0
      %400 = vmatpush.msra.mxu0 0.0
      %401 = vmatpush.msra.mxu0 0.0
      %402 = vmatpush.msra.mxu0 %v383
      %403 = vmatpush.msra.mxu0 %v381
      %404 = vmatpush.msra.mxu0 %v379
      %405 = vmatpush.msra.mxu0 %v377
      %406 = vmatmul.f32.gmra.mxu0 %v388
      %v407 = vpop.f32.mrf.mxu0
      %v408 = vadd.f32 0.0, %v407
      %409 = vdwg.mxu0
      %410 = vmatpush.msra.mxu0 0.0
      %411 = vmatpush.msra.mxu0 0.0
      %412 = vmatpush.msra.mxu0 0.0
      %413 = vmatpush.msra.mxu0 0.0
      %414 = vmatpush.msra.mxu0 0.0
      %415 = vmatpush.msra.mxu0 0.0
      %416 = vmatpush.msra.mxu0 0.0
      %417 = vmatpush.msra.mxu0 0.0
      %418 = vmatpush.msra.mxu0 0.0
      %419 = vmatpush.msra.mxu0 0.0
      %420 = vmatpush.msra.mxu0 0.0
      %421 = vmatpush.msra.mxu0 0.0
      %422 = vmatpush.msra.mxu0 %v384
      %423 = vmatpush.msra.mxu0 %v382
      %424 = vmatpush.msra.mxu0 %v380
      %425 = vmatpush.msra.mxu0 %v378
      %426 = vmatmul.f32.gmra.mxu0 %v388
      %v427 = vpop.f32.mrf.mxu0
      %v428 = vadd.f32 0.0, %v427
      %429 = vdwg.mxu0
      %v430 = vld [vmem:[%s257] sm:$0xf]
      %v432 = vunpack.c.l.s4 1983009808
      %v433 = vunpack.c.0.s8 %v432
      %v434 = vperm.slane %v408, %v433
      %v436 = vunpack.c.l.s4 1983009808
      %v437 = vunpack.c.0.s8 %v436
      %v438 = vperm.slane %v428, %v437
      %v439 = vrot.slane %v438, 4
      %vm440 = vcmask 1047556
      %v441 = vsel %vm440, %v439, %v434
      %v442 = vrot.slane %v434, 4
      %v443 = vsel %vm440, %v438, %v442
      %v445 = vunpack.c.l.s4 1934713408
      %v446 = vunpack.c.0.s8 %v445
      %v447 = vperm.slane %v441, %v446
      %v449 = vunpack.c.l.s4 1934713408
      %v450 = vunpack.c.0.s8 %v449
      %v451 = vperm.slane %v443, %v450
      %v452 = vrot.slane %v447, 4
      %v453 = vsel %vm440, 0.0, %v452
      %v454 = vrot.slane %v451, 4
      %v455 = vsel %vm440, 0.0, %v454
      %vm456 = vcmask 1041408
      %v457 = vsel %vm456, %v447, 0.0
      %v458 = vrot.slane %v457, 4
      %v459 = vadd.f32 %v457, %v458
      %v460 = vrot.slane %v459, 2
      %v461 = vadd.f32 %v459, %v460
      %v462 = vrot.slane %v461, 1
      %v463 = vadd.f32 %v461, %v462
      %v464 = vsel %vm456, %v453, 0.0
      %v465 = vrot.slane %v464, 4
      %v466 = vadd.f32 %v464, %v465
      %v467 = vrot.slane %v466, 2
      %v468 = vadd.f32 %v466, %v467
      %v469 = vrot.slane %v468, 1
      %v470 = vadd.f32 %v468, %v469
      %v471 = vsel %vm456, %v451, 0.0
      %v472 = vrot.slane %v471, 4
      %v473 = vadd.f32 %v471, %v472
      %v474 = vrot.slane %v473, 2
      %v475 = vadd.f32 %v473, %v474
      %v476 = vrot.slane %v475, 1
      %v477 = vadd.f32 %v475, %v476
      %v478 = vsel %vm456, %v455, 0.0
      %v479 = vrot.slane %v478, 4
      %v480 = vadd.f32 %v478, %v479
      %v481 = vrot.slane %v480, 2
      %v482 = vadd.f32 %v480, %v481
      %v483 = vrot.slane %v482, 1
      %v484 = vadd.f32 %v482, %v483
      %vm489 = vcmask 1041409
      %v490 = vsel %vm489, %v470, %v463
      %vm491 = vcmask 1042434
      %v492 = vsel %vm491, %v477, %v490
      %vm493 = vcmask 1043459
      %v494 = vsel %vm493, %v484, %v492
      %v496 = vadd.f32 %v430, %v494
      %497 = vst [vmem:[%s257] sm:$0xf] %v496
      %v498 = vld [vmem:[%s261] sm:$0xf]
      %v499 = vmul.f32 %v408, %v408
      %v501 = vunpack.c.l.s4 1983009808
      %v502 = vunpack.c.0.s8 %v501
      %v503 = vperm.slane %v499, %v502
      %v504 = vmul.f32 %v428, %v428
      %v506 = vunpack.c.l.s4 1983009808
      %v507 = vunpack.c.0.s8 %v506
      %v508 = vperm.slane %v504, %v507
      %v509 = vrot.slane %v508, 4
      %v510 = vsel %vm440, %v509, %v503
      %v511 = vrot.slane %v503, 4
      %v512 = vsel %vm440, %v508, %v511
      %v514 = vunpack.c.l.s4 1934713408
      %v515 = vunpack.c.0.s8 %v514
      %v516 = vperm.slane %v510, %v515
      %v518 = vunpack.c.l.s4 1934713408
      %v519 = vunpack.c.0.s8 %v518
      %v520 = vperm.slane %v512, %v519
      %v521 = vrot.slane %v516, 4
      %v522 = vsel %vm440, 0.0, %v521
      %v523 = vrot.slane %v520, 4
      %v524 = vsel %vm440, 0.0, %v523
      %v525 = vsel %vm456, %v516, 0.0
      %v526 = vrot.slane %v525, 4
      %v527 = vadd.f32 %v525, %v526
      %v528 = vrot.slane %v527, 2
      %v529 = vadd.f32 %v527, %v528
      %v530 = vrot.slane %v529, 1
      %v531 = vadd.f32 %v529, %v530
      %v532 = vsel %vm456, %v522, 0.0
      %v533 = vrot.slane %v532, 4
      %v534 = vadd.f32 %v532, %v533
      %v535 = vrot.slane %v534, 2
      %v536 = vadd.f32 %v534, %v535
      %v537 = vrot.slane %v536, 1
      %v538 = vadd.f32 %v536, %v537
      %v539 = vsel %vm456, %v520, 0.0
      %v540 = vrot.slane %v539, 4
      %v541 = vadd.f32 %v539, %v540
      %v542 = vrot.slane %v541, 2
      %v543 = vadd.f32 %v541, %v542
      %v544 = vrot.slane %v543, 1
      %v545 = vadd.f32 %v543, %v544
      %v546 = vsel %vm456, %v524, 0.0
      %v547 = vrot.slane %v546, 4
      %v548 = vadd.f32 %v546, %v547
      %v549 = vrot.slane %v548, 2
      %v550 = vadd.f32 %v548, %v549
      %v551 = vrot.slane %v550, 1
      %v552 = vadd.f32 %v550, %v551
      %v557 = vsel %vm489, %v538, %v531
      %v558 = vsel %vm491, %v545, %v557
      %v559 = vsel %vm493, %v552, %v558
      %v561 = vadd.f32 %v498, %v559
      %562 = vst [vmem:[%s261] sm:$0xf] %v561
      %p563 = scmp.lt.s32.totalorder %s21, 1
      %s564 = scalar_select %p563, %s21, 1
      %s565 = smul.addr %s564, 4
      %s566 = scalar_lea.vmem %s4, %s565
      %p567 = scmp.lt.s32.totalorder %s21, 1
      %s568 = scalar_select %p567, %s21, 1
      %s569 = smul.addr %s568, 4
      %s570 = scalar_lea.vmem %s5, %s569
      // Predicated region
      $region41: #{channel_block_forward.4} parent=35 // pred_check
        %p571 = pneg %p138
      $region42: #{channel_block_forward.4} parent=35 // pred_check_branch
        %573 = sbr.rel (%p571) target = $region44
      $region43: #{channel_block_forward.4} parent=35 // pred_region
        _
      $region44: #{channel_block_forward.4} parent=35 // pred_fallthru
        _
      // Predicated region
      $region45: #{channel_block_forward.4} parent=35 // pred_check
        %p574 = pneg %p164
      $region46: #{channel_block_forward.4} parent=35 // pred_check_branch
        %576 = sbr.rel (%p574) target = $region48
      $region47: #{channel_block_forward.4} parent=35 // pred_region
        _
      $region48: #{channel_block_forward.4} parent=35 // pred_fallthru
        _
    $region36: #{channel_block_forward.4} parent=5 // pred_fallthru
      _
    %p577 = scmp.le.s32.totalorder 2, %s12
    // Predicated region
    $region49: #{channel_block_forward.4} parent=5 // pred_check
      %p578 = pneg %p577
    $region50: #{channel_block_forward.4} parent=5 // pred_check_branch
      %580 = sbr.rel (%p578) target = $region52
    $region51: #{channel_block_forward.4} parent=5 // pred_region
      %s581 = ssub.s32 %s12, 2
      // Predicated region
      $region53: #{channel_block_forward.4} parent=51 // pred_check
        %p582 = pneg %p144
      $region54: #{channel_block_forward.4} parent=51 // pred_check_branch
        %584 = sbr.rel (%p582) target = $region56
      $region55: #{channel_block_forward.4} parent=51 // pred_region
        %p585 = scmp.lt.s32.totalorder %s23, 1
        %s586 = scalar_select %p585, %s23, 1
        %s587 = smul.addr %s586, 4
        %s588 = scalar_lea.vmem %s4, %s587
      $region56: #{channel_block_forward.4} parent=51 // pred_fallthru
        _
      // Predicated region
      $region57: #{channel_block_forward.4} parent=51 // pred_check
        %p589 = pneg %p170
      $region58: #{channel_block_forward.4} parent=51 // pred_check_branch
        %591 = sbr.rel (%p589) target = $region60
      $region59: #{channel_block_forward.4} parent=51 // pred_region
        %p592 = scmp.lt.s32.totalorder %s23, 1
        %s593 = scalar_select %p592, %s23, 1
        %s594 = smul.addr %s593, 4
        %s595 = scalar_lea.vmem %s5, %s594
      $region60: #{channel_block_forward.4} parent=51 // pred_fallthru
        _
    $region52: #{channel_block_forward.4} parent=5 // pred_fallthru
      _
  $region6: #{channel_block_forward.4} parent=0 // loop_footer
    %s16 = sadd.s32 1, %s12
  $region7: #{channel_block_forward.4} parent=0 // loop_footer_branch
    %11 = sbr.rel target = $region3
  $region8: #{channel_block_forward.4} parent=0 // loop_exit
    _

// kernel: channel_block_forward.5
$region0: #{channel_block_forward.5}
  #allocation0 [shape = 'u32[]', space=smem, size = 0x4, offset = 0x4, fixed_abs, tag = 'smem constant byte address 0x4 - core index']
  #allocation1 [shape = 'u32[72,128]{1,0:T(1,128)}', space=vmem, size = 0x9000, scoped, tag = 'internal scratch']
  %s0 = inlined_call_operand.vmem [shape: f32[2,4,256], index: 0, kind: input, shape index: {}]
  %s1 = inlined_call_operand.vmem [shape: f32[32,4], index: 1, kind: input, shape index: {}]
  %s2 = inlined_call_operand.vmem [shape: f32[32,1], index: 2, kind: input, shape index: {}]
  %s3 = inlined_call_operand.vmem [shape: f32[4,32], index: 3, kind: input, shape index: {}]
  %s4 = inlined_call_operand.vmem [shape: f32[4,1], index: 4, kind: input, shape index: {}]
  %s5 = inlined_call_operand.vmem [shape: f32[2,4,256], index: 5, kind: output, shape index: {}]
  %s6 = sld [smem:[#allocation0]]
  $region53: #{channel_block_forward.5} parent=0
    _
  %s8 = ssub.s32 1, %s6
  %s9 = scalar_select 0, %s8, %s6
  loop: start=0, step=1, limit=4
  $region2: #{channel_block_forward.5} parent=0 // loop_pre_header
    _
  $region3: #{channel_block_forward.5} parent=0 // loop_header
    %s11 = sphi 0, %s15
    %p12 = scmp.ge.s32.totalorder %s11, 4
    %s18 = sphi 0, %s30
    %s19 = sphi 0, %s26
    %s20 = sphi 0, %s18
    %s21 = sphi 0, %s19
    %s22 = sphi 0, %s20
    %s23 = sphi 0, %s21
    %s35 = sphi 0, %s37
    %s38 = sphi 0, %s35
    %s39 = sphi 0, %s38
    %s55 = sphi 0, %s39
    %s59 = sphi 0, %s59
    %s61 = sphi 0, %s59
    %s62 = sphi 0, %s61
    %s76 = sphi 0, %s62
    %s80 = sphi 0, %s80
    %s82 = sphi 0, %s80
    %s83 = sphi 0, %s82
    %s97 = sphi 0, %s83
    %s101 = sphi 0, %s101
    %s103 = sphi 0, %s101
    %s104 = sphi 0, %s103
    %s118 = sphi 0, %s104
    %s122 = sphi 0, %s122
    %s124 = sphi 0, %s122
    %s125 = sphi 0, %s124
    %s139 = sphi 0, %s125
    %s147 = sphi 0, %s149
    %s150 = sphi 0, %s147
    %s151 = sphi 0, %s150
    %s167 = sphi 0, %s151
  $region4: #{channel_block_forward.5} parent=0 // loop_header_branch
    %14 = sbr.rel (%p12) target = $region8
  $region5: #{channel_block_forward.5} parent=0 // loop_body
    %s16 = ssub.s32 %s11, 1
    %s17 = ssub.s32 %s11, 2
    %s24 = sadd.s32 1, %s19
    %p25 = scmp.ge.s32.totalorder %s24, 1
    %s26 = scalar_select %p25, 0, %s24
    %s27 = sadd.s32 1, %s18
    %s28 = scalar_select %p25, %s27, %s18
    %p29 = scmp.ge.s32.totalorder %s28, 2
    %s30 = scalar_select %p29, 0, %s28
    %s31 = ssub.s32 %s18, %s30
    %s32 = ssub.s32 %s19, %s26
    %s33 = sor.u32 %s31, %s32
    %p34 = scmp.eq.s32.totalorder %s33, 0
    %s36 = sadd.s32 %s35, 1
    %s37 = scalar_select %p34, %s35, %s36
    %p40 = pneg %p34
    %p41 = scmp.eq.s32.totalorder %s11, 1
    %p42 = por %p40, %p41
    %p43 = scmp.ne.s32.totalorder %s35, %s38
    %p44 = scmp.eq.s32.totalorder %s11, 0
    %p45 = por %p43, %p44
    %p46 = scmp.ne.s32.totalorder %s35, %s38
    %p47 = scmp.eq.s32.totalorder %s16, 1
    %p48 = por %p46, %p47
    %p49 = scmp.ne.s32.totalorder %s38, %s39
    %p50 = scmp.eq.s32.totalorder %s16, 0
    %p51 = por %p49, %p50
    %p52 = scmp.ne.s32.totalorder %s38, %s39
    %p53 = scmp.eq.s32.totalorder %s17, 1
    %p54 = por %p52, %p53
    %p56 = scmp.ne.s32.totalorder %s39, %s55
    %p57 = scmp.eq.s32.totalorder %s17, 0
    %p58 = por %p56, %p57
    %s60 = sadd.s32 %s59, 1
    %p63 = scmp.eq.s32.totalorder %s11, 1
    %p64 = scmp.ne.s32.totalorder %s59, %s61
    %p65 = scmp.eq.s32.totalorder %s11, 0
    %p66 = por %p64, %p65
    %p67 = scmp.ne.s32.totalorder %s59, %s61
    %p68 = scmp.eq.s32.totalorder %s16, 1
    %p69 = por %p67, %p68
    %p70 = scmp.ne.s32.totalorder %s61, %s62
    %p71 = scmp.eq.s32.totalorder %s16, 0
    %p72 = por %p70, %p71
    %p73 = scmp.ne.s32.totalorder %s61, %s62
    %p74 = scmp.eq.s32.totalorder %s17, 1
    %p75 = por %p73, %p74
    %p77 = scmp.ne.s32.totalorder %s62, %s76
    %p78 = scmp.eq.s32.totalorder %s17, 0
    %p79 = por %p77, %p78
    %s81 = sadd.s32 %s80, 1
    %p84 = scmp.eq.s32.totalorder %s11, 1
    %p85 = scmp.ne.s32.totalorder %s80, %s82
    %p86 = scmp.eq.s32.totalorder %s11, 0
    %p87 = por %p85, %p86
    %p88 = scmp.ne.s32.totalorder %s80, %s82
    %p89 = scmp.eq.s32.totalorder %s16, 1
    %p90 = por %p88, %p89
    %p91 = scmp.ne.s32.totalorder %s82, %s83
    %p92 = scmp.eq.s32.totalorder %s16, 0
    %p93 = por %p91, %p92
    %p94 = scmp.ne.s32.totalorder %s82, %s83
    %p95 = scmp.eq.s32.totalorder %s17, 1
    %p96 = por %p94, %p95
    %p98 = scmp.ne.s32.totalorder %s83, %s97
    %p99 = scmp.eq.s32.totalorder %s17, 0
    %p100 = por %p98, %p99
    %s102 = sadd.s32 %s101, 1
    %p105 = scmp.eq.s32.totalorder %s11, 1
    %p106 = scmp.ne.s32.totalorder %s101, %s103
    %p107 = scmp.eq.s32.totalorder %s11, 0
    %p108 = por %p106, %p107
    %p109 = scmp.ne.s32.totalorder %s101, %s103
    %p110 = scmp.eq.s32.totalorder %s16, 1
    %p111 = por %p109, %p110
    %p112 = scmp.ne.s32.totalorder %s103, %s104
    %p113 = scmp.eq.s32.totalorder %s16, 0
    %p114 = por %p112, %p113
    %p115 = scmp.ne.s32.totalorder %s103, %s104
    %p116 = scmp.eq.s32.totalorder %s17, 1
    %p117 = por %p115, %p116
    %p119 = scmp.ne.s32.totalorder %s104, %s118
    %p120 = scmp.eq.s32.totalorder %s17, 0
    %p121 = por %p119, %p120
    %s123 = sadd.s32 %s122, 1
    %p126 = scmp.eq.s32.totalorder %s11, 1
    %p127 = scmp.ne.s32.totalorder %s122, %s124
    %p128 = scmp.eq.s32.totalorder %s11, 0
    %p129 = por %p127, %p128
    %p130 = scmp.ne.s32.totalorder %s122, %s124
    %p131 = scmp.eq.s32.totalorder %s16, 1
    %p132 = por %p130, %p131
    %p133 = scmp.ne.s32.totalorder %s124, %s125
    %p134 = scmp.eq.s32.totalorder %s16, 0
    %p135 = por %p133, %p134
    %p136 = scmp.ne.s32.totalorder %s124, %s125
    %p137 = scmp.eq.s32.totalorder %s17, 1
    %p138 = por %p136, %p137
    %p140 = scmp.ne.s32.totalorder %s125, %s139
    %p141 = scmp.eq.s32.totalorder %s17, 0
    %p142 = por %p140, %p141
    %s143 = ssub.s32 %s18, %s30
    %s144 = ssub.s32 %s19, %s26
    %s145 = sor.u32 %s143, %s144
    %p146 = scmp.eq.s32.totalorder %s145, 0
    %s148 = sadd.s32 %s147, 1
    %s149 = scalar_select %p146, %s147, %s148
    %p152 = pneg %p146
    %p153 = scmp.eq.s32.totalorder %s11, 1
    %p154 = por %p152, %p153
    %p155 = scmp.ne.s32.totalorder %s147, %s150
    %p156 = scmp.eq.s32.totalorder %s11, 0
    %p157 = por %p155, %p156
    %p158 = scmp.ne.s32.totalorder %s147, %s150
    %p159 = scmp.eq.s32.totalorder %s16, 1
    %p160 = por %p158, %p159
    %p161 = scmp.ne.s32.totalorder %s150, %s151
    %p162 = scmp.eq.s32.totalorder %s16, 0
    %p163 = por %p161, %p162
    %p164 = scmp.ne.s32.totalorder %s150, %s151
    %p165 = scmp.eq.s32.totalorder %s17, 1
    %p166 = por %p164, %p165
    %p168 = scmp.ne.s32.totalorder %s151, %s167
    %p169 = scmp.eq.s32.totalorder %s17, 0
    %p170 = por %p168, %p169
    %p171 = scmp.le.s32.totalorder 1, %s11
    %p172 = scmp.lt.s32.totalorder %s11, 3
    %p173 = pnand %p171, %p172
    %p174 = pneg %p173
    // Predicated region
    $region9: #{channel_block_forward.5} parent=5 // pred_check
      _
    $region10: #{channel_block_forward.5} parent=5 // pred_check_branch
      %176 = sbr.rel (%p173) target = $region12
    $region11: #{channel_block_forward.5} parent=5 // pred_region
      %s177 = ssub.s32 %s11, 1
      // Predicated region
      $region13: #{channel_block_forward.5} parent=11 // pred_check
        %p178 = pneg %p72
      $region14: #{channel_block_forward.5} parent=11 // pred_check_branch
        %180 = sbr.rel (%p178) target = $region16
      $region15: #{channel_block_forward.5} parent=11 // pred_region
        _
      $region16: #{channel_block_forward.5} parent=11 // pred_fallthru
        _
      // Predicated region
      $region17: #{channel_block_forward.5} parent=11 // pred_check
        %p181 = pneg %p93
      $region18: #{channel_block_forward.5} parent=11 // pred_check_branch
        %183 = sbr.rel (%p181) target = $region20
      $region19: #{channel_block_forward.5} parent=11 // pred_region
        _
      $region20: #{channel_block_forward.5} parent=11 // pred_fallthru
        _
      // Predicated region
      $region21: #{channel_block_forward.5} parent=11 // pred_check
        %p184 = pneg %p114
      $region22: #{channel_block_forward.5} parent=11 // pred_check_branch
        %186 = sbr.rel (%p184) target = $region24
      $region23: #{channel_block_forward.5} parent=11 // pred_region
        _
      $region24: #{channel_block_forward.5} parent=11 // pred_fallthru
        _
      // Predicated region
      $region25: #{channel_block_forward.5} parent=11 // pred_check
        %p187 = pneg %p135
      $region26: #{channel_block_forward.5} parent=11 // pred_check_branch
        %189 = sbr.rel (%p187) target = $region28
      $region27: #{channel_block_forward.5} parent=11 // pred_region
        _
      $region28: #{channel_block_forward.5} parent=11 // pred_fallthru
        _
    $region12: #{channel_block_forward.5} parent=5 // pred_fallthru
      _
    %p190 = scmp.lt.s32.totalorder %s11, 2
    // Predicated region
    $region29: #{channel_block_forward.5} parent=5 // pred_check
      %p191 = pneg %p190
    $region30: #{channel_block_forward.5} parent=5 // pred_check_branch
      %193 = sbr.rel (%p191) target = $region32
    $region31: #{channel_block_forward.5} parent=5 // pred_region
      // Predicated region
      $region33: #{channel_block_forward.5} parent=31 // pred_check
        %p194 = pneg %p45
      $region34: #{channel_block_forward.5} parent=31 // pred_check_branch
        %196 = sbr.rel (%p194) target = $region36
      $region35: #{channel_block_forward.5} parent=31 // pred_region
        %s197 = smul.u32 2, %s19
        %p198 = scmp.lt.s32.totalorder %s18, 1
        %s199 = scalar_select %p198, %s18, 1
        %p200 = scmp.lt.s32.totalorder %s197, 1
        %s201 = scalar_select %p200, %s197, 1
        %s202 = smul.addr %s199, 2
        %s203 = sadd.s32 %s201, %s202
        %s204 = smul.addr %s203, 4
        %s205 = scalar_lea.vmem %s0, %s204
        %s206 = smul.u32 2, %s19
      $region36: #{channel_block_forward.5} parent=31 // pred_fallthru
        _
    $region32: #{channel_block_forward.5} parent=5 // pred_fallthru
      _
    %p207 = scmp.le.s32.totalorder 1, %s11
    %p208 = scmp.lt.s32.totalorder %s11, 3
    %p209 = pnand %p207, %p208
    %p210 = pneg %p209
    // Predicated region
    $region37: #{channel_block_forward.5} parent=5 // pred_check
      _
    $region38: #{channel_block_forward.5} parent=5 // pred_check_branch
      %212 = sbr.rel (%p209) target = $region40
    $region39: #{channel_block_forward.5} parent=5 // pred_region
      %s213 = ssub.s32 %s11, 1
      %s214 = smul.u32 2, %s21
      %p215 = scmp.lt.s32.totalorder %s20, 1
      %s216 = scalar_select %p215, %s20, 1
      %p217 = scmp.lt.s32.totalorder %s214, 1
      %s218 = scalar_select %p217, %s214, 1
      %s219 = smul.addr %s216, 2
      %s220 = sadd.s32 %s218, %s219
      %s221 = smul.addr %s220, 4
      %s222 = scalar_lea.vmem %s0, %s221
      %p223 = pneg %p51
      %p224 = pneg %p48
      %p225 = pneg %p72
      %p226 = pneg %p69
      %p227 = pneg %p93
      %p228 = pneg %p90
      %p229 = pneg %p114
      %p230 = pneg %p111
      %p231 = pneg %p135
      %p232 = pneg %p132
      %p233 = pneg %p163
      %p234 = pneg %p160
      %s235 = smul.u32 2, %s21
      %p236 = scmp.lt.s32.totalorder %s20, 1
      %s237 = scalar_select %p236, %s20, 1
      %p238 = scmp.lt.s32.totalorder %s235, 1
      %s239 = scalar_select %p238, %s235, 1
      %s240 = smul.addr %s237, 2
      %s241 = sadd.s32 %s239, %s240
      %s242 = smul.addr %s241, 4
      %s243 = scalar_lea.vmem %s5, %s242
      %s244 = smul.u32 2, %s21
      %p245 = scmp.lt.s32.totalorder %s20, 1
      %s246 = scalar_select %p245, %s20, 1
      %p247 = scmp.lt.s32.totalorder %s244, 1
      %s248 = scalar_select %p247, %s244, 1
      %s249 = smul.addr %s246, 2
      %s250 = sadd.s32 %s248, %s249
      %s251 = smul.addr %s250, 4
      %s252 = scalar_lea.vmem %s0, %s251
      %s253 = smul.u32 2, %s21
      %s254 = smul.u32 2, %s21
      %p255 = scmp.lt.s32.totalorder %s20, 1
      %s256 = scalar_select %p255, %s20, 1
      %p257 = scmp.lt.s32.totalorder %s254, 1
      %s258 = scalar_select %p257, %s254, 1
      %s259 = smul.addr %s256, 2
      %s260 = sadd.s32 %s258, %s259
      %s261 = smul.addr %s260, 4
      %s262 = scalar_lea.vmem %s5, %s261
      %s263 = smul.u32 2, %s21
      %v264 = vld [vmem:[%s252] sm:$0xff]
      %v265 = vld [vmem:[%s1] sm:$0xff]
      %v266 = vld [vmem:[%s1 + $0x8] sm:$0xff]
      %v267 = vld [vmem:[%s1 + $0x10] sm:$0xff]
      %v268 = vld [vmem:[%s1 + $0x18] sm:$0xff]
      %v269 = vld [vmem:[%s2] sm:$0xff]
      %v270 = vld [vmem:[%s2 + $0x8] sm:$0xff]
      %v271 = vld [vmem:[%s2 + $0x10] sm:$0xff]
      %v272 = vld [vmem:[%s2 + $0x18] sm:$0xff]
      %274 = vset.pattern.permute.xlu0 0
      %275 = vperm.xlu0 %274, %v269
      %v276 = vpop.permute.xlu0 %275
      %279 = vset.pattern.permute.xlu0 0
      %280 = vperm.xlu0 %279, %v270
      %v281 = vpop.permute.xlu0 %280
      %284 = vset.pattern.permute.xlu0 0
      %285 = vperm.xlu0 %284, %v271
      %v286 = vpop.permute.xlu0 %285
      %289 = vset.pattern.permute.xlu0 0
      %290 = vperm.xlu0 %289, %v272
      %v291 = vpop.permute.xlu0 %290
      %294 = vst [vmem:[#allocation1] ss:$2 sm:$0xff] %v264
      %v295 = vld.sshfl [vmem:[#allocation1] sm:$0xff pattern:$0x75316420]
      %v296 = vld.sshfl [vmem:[#allocation1 + $0x8] sm:$0xff pattern:$0x75316420]
      %vm297 = vcmask 31744
      %v299 = vsel %vm297, %v265, 0
      %v302 = vsel %vm297, %v266, 0
      %v305 = vsel %vm297, %v267, 0
      %v308 = vsel %vm297, %v268, 0
      %vm310 = vcmask 1043456
      %v311 = vsel %vm310, %v295, 0
      %v313 = vsel %vm310, %v296, 0
      %315 = vmatpush.msra.mxu0 0.0
      %316 = vmatpush.msra.mxu0 0.0
      %317 = vmatpush.msra.mxu0 0.0
      %318 = vmatpush.msra.mxu0 0.0
      %319 = vmatpush.msra.mxu0 0.0
      %320 = vmatpush.msra.mxu0 0.0
      %321 = vmatpush.msra.mxu0 0.0
      %322 = vmatpush.msra.mxu0 0.0
      %323 = vmatpush.msra.mxu0 0.0
      %324 = vmatpush.msra.mxu0 0.0
      %325 = vmatpush.msra.mxu0 0.0
      %326 = vmatpush.msra.mxu0 0.0
      %327 = vmatpush.msra.mxu0 0.0
      %328 = vmatpush.msra.mxu0 0.0
      %329 = vmatpush.msra.mxu0 0.0
      %330 = vmatpush.msra.mxu0 %v311
      %331 = vmatmul.f32.gmra.mxu0 %v299
      %v332 = vpop.f32.mrf.mxu0
      %v333 = vadd.f32 %v276, %v332
      %334 = vmatmul.f32.gmra.mxu0 %v302
      %v335 = vpop.f32.mrf.mxu0
      %v336 = vadd.f32 %v281, %v335
      %337 = vmatmul.f32.gmra.mxu0 %v305
      %v338 = vpop.f32.mrf.mxu0
      %v339 = vadd.f32 %v286, %v338
      %340 = vmatmul.f32.gmra.mxu0 %v308
      %v341 = vpop.f32.mrf.mxu0
      %v342 = vadd.f32 %v291, %v341
      %343 = vdwg.mxu0
      %344 = vmatpush.msra.mxu0 0.0
      %345 = vmatpush.msra.mxu0 0.0
      %346 = vmatpush.msra.mxu0 0.0
      %347 = vmatpush.msra.mxu0 0.0
      %348 = vmatpush.msra.mxu0 0.0
      %349 = vmatpush.msra.mxu0 0.0
      %350 = vmatpush.msra.mxu0 0.0
      %351 = vmatpush.msra.mxu0 0.0
      %352 = vmatpush.msra.mxu0 0.0
      %353 = vmatpush.msra.mxu0 0.0
      %354 = vmatpush.msra.mxu0 0.0
      %355 = vmatpush.msra.mxu0 0.0
      %356 = vmatpush.msra.mxu0 0.0
      %357 = vmatpush.msra.mxu0 0.0
      %358 = vmatpush.msra.mxu0 0.0
      %359 = vmatpush.msra.mxu0 %v313
      %360 = vmatmul.f32.gmra.mxu0 %v299
      %v361 = vpop.f32.mrf.mxu0
      %v362 = vadd.f32 %v276, %v361
      %363 = vmatmul.f32.gmra.mxu0 %v302
      %v364 = vpop.f32.mrf.mxu0
      %v365 = vadd.f32 %v281, %v364
      %366 = vmatmul.f32.gmra.mxu0 %v305
      %v367 = vpop.f32.mrf.mxu0
      %v368 = vadd.f32 %v286, %v367
      %369 = vmatmul.f32.gmra.mxu0 %v308
      %v370 = vpop.f32.mrf.mxu0
      %v371 = vadd.f32 %v291, %v370
      %372 = vdwg.mxu0
      %v373 = vmax.f32 %v333, 0.0
      %v374 = vmax.f32 %v362, 0.0
      %v375 = vmax.f32 %v336, 0.0
      %v376 = vmax.f32 %v365, 0.0
      %v377 = vmax.f32 %v339, 0.0
      %v378 = vmax.f32 %v368, 0.0
      %v379 = vmax.f32 %v342, 0.0
      %v380 = vmax.f32 %v371, 0.0
      %v381 = vld [vmem:[%s3] sm:$0xf]
      %v382 = vld [vmem:[%s4] sm:$0xf]
      %384 = vset.pattern.permute.xlu0 0
      %385 = vperm.xlu0 %384, %v382
      %v386 = vpop.permute.xlu0 %385
      %vm388 = vcmask 261120
      %v390 = vsel %vm388, %v381, 0
      %392 = vmatpush.msra.mxu0 0.0
      %393 = vmatpush.msra.mxu0 0.0
      %394 = vmatpush.msra.mxu0 0.0
      %395 = vmatpush.msra.mxu0 0.0
      %396 = vmatpush.msra.mxu0 0.0
      %397 = vmatpush.msra.mxu0 0.0
      %398 = vmatpush.msra.mxu0 0.0
      %399 = vmatpush.msra.mxu0 0.0
      %400 = vmatpush.msra.mxu0 0.0
      %401 = vmatpush.msra.mxu0 0.0
      %402 = vmatpush.msra.mxu0 0.0
      %403 = vmatpush.msra.mxu0 0.0
      %404 = vmatpush.msra.mxu0 %v379
      %405 = vmatpush.msra.mxu0 %v377
      %406 = vmatpush.msra.mxu0 %v375
      %407 = vmatpush.msra.mxu0 %v373
      %408 = vmatmul.f32.gmra.mxu0 %v390
      %v409 = vpop.f32.mrf.mxu0
      %v410 = vadd.f32 %v386, %v409
      %411 = vdwg.mxu0
      %412 = vmatpush.msra.mxu0 0.0
      %413 = vmatpush.msra.mxu0 0.0
      %414 = vmatpush.msra.mxu0 0.0
      %415 = vmatpush.msra.mxu0 0.0
      %416 = vmatpush.msra.mxu0 0.0
      %417 = vmatpush.msra.mxu0 0.0
      %418 = vmatpush.msra.mxu0 0.0
      %419 = vmatpush.msra.mxu0 0.0
      %420 = vmatpush.msra.mxu0 0.0
      %421 = vmatpush.msra.mxu0 0.0
      %422 = vmatpush.msra.mxu0 0.0
      %423 = vmatpush.msra.mxu0 0.0
      %424 = vmatpush.msra.mxu0 %v380
      %425 = vmatpush.msra.mxu0 %v378
      %426 = vmatpush.msra.mxu0 %v376
      %427 = vmatpush.msra.mxu0 %v374
      %428 = vmatmul.f32.gmra.mxu0 %v390
      %v429 = vpop.f32.mrf.mxu0
      %v430 = vadd.f32 %v386, %v429
      %431 = vdwg.mxu0
      %v434 = vrot.slane %v430, 4
      %v435 = vsel %vm310, %v410, %v434
      %437 = vst [vmem:[%s262] sm:$0xff] %v435
      %s438 = smul.u32 2, %s21
      %p439 = scmp.lt.s32.totalorder %s20, 1
      %s440 = scalar_select %p439, %s20, 1
      %p441 = scmp.lt.s32.totalorder %s438, 1
      %s442 = scalar_select %p441, %s438, 1
      %s443 = smul.addr %s440, 2
      %s444 = sadd.s32 %s442, %s443
      %s445 = smul.addr %s444, 4
      %s446 = scalar_lea.vmem %s5, %s445
      // Predicated region
      $region41: #{channel_block_forward.5} parent=39 // pred_check
        %p447 = pneg %p160
      $region42: #{channel_block_forward.5} parent=39 // pred_check_branch
        %449 = sbr.rel (%p447) target = $region44
      $region43: #{channel_block_forward.5} parent=39 // pred_region
        %s450 = smul.u32 2, %s21
      $region44: #{channel_block_forward.5} parent=39 // pred_fallthru
        _
    $region40: #{channel_block_forward.5} parent=5 // pred_fallthru
      _
    %p451 = scmp.le.s32.totalorder 2, %s11
    // Predicated region
    $region45: #{channel_block_forward.5} parent=5 // pred_check
      %p452 = pneg %p451
    $region46: #{channel_block_forward.5} parent=5 // pred_check_branch
      %454 = sbr.rel (%p452) target = $region48
    $region47: #{channel_block_forward.5} parent=5 // pred_region
      %s455 = ssub.s32 %s11, 2
      // Predicated region
      $region49: #{channel_block_forward.5} parent=47 // pred_check
        %p456 = pneg %p166
      $region50: #{channel_block_forward.5} parent=47 // pred_check_branch
        %458 = sbr.rel (%p456) target = $region52
      $region51: #{channel_block_forward.5} parent=47 // pred_region
        %s459 = smul.u32 2, %s23
        %p460 = scmp.lt.s32.totalorder %s22, 1
        %s461 = scalar_select %p460, %s22, 1
        %p462 = scmp.lt.s32.totalorder %s459, 1
        %s463 = scalar_select %p462, %s459, 1
        %s464 = smul.addr %s461, 2
        %s465 = sadd.s32 %s463, %s464
        %s466 = smul.addr %s465, 4
        %s467 = scalar_lea.vmem %s5, %s466
      $region52: #{channel_block_forward.5} parent=47 // pred_fallthru
        _
    $region48: #{channel_block_forward.5} parent=5 // pred_fallthru
      _
  $region6: #{channel_block_forward.5} parent=0 // loop_footer
    %s15 = sadd.s32 1, %s11
  $region7: #{channel_block_forward.5} parent=0 // loop_footer_branch
    %10 = sbr.rel target = $region3
  $region8: #{channel_block_forward.5} parent=0 // loop_exit
    _

</llo_original>
